<compile_context>
chip_gen: v5e
topology: v5e:2x2
jax: 0.10.0
libtpu: 0.0.40
codegen_flags: <defaults>
</compile_context>

<pallas_src>
import numpy as np
import jax
import jax.numpy as jnp
from jax import lax
from jax.experimental import pallas as pl
from jax.experimental.pallas import tpu as pltpu


OUT_LANES = 128  # pad the linear output channels to a full lane tile


def _round_up(n, m):
    return ((n + m - 1) // m) * m


def _conv_out_len(l, k, stride, pad):
    return (l + 2 * pad - k) // stride + 1


# --------------------------------------------------------------------------- #
# Kernel: one grid step = TB batch samples = 4 chained 2-D MXU matmuls.
# --------------------------------------------------------------------------- #
def _conv_base_kernel(x_ref, w1_ref, b1_ref, w2_ref, b2_ref, w3_ref, b3_ref,
                      wl_ref, bl_ref, o_ref):
    """
    x_ref  : (TB, L)            raw input block (padding baked into W1)
    w1_ref : (L,  P1)  b1_ref : (1, P1)     conv1 folded weight / bias
    w2_ref : (P1, P2)  b2_ref : (1, P2)     conv2
    w3_ref : (P2, P3)  b3_ref : (1, P3)     conv3
    wl_ref : (P3, 128) bl_ref : (1, 128)    flatten + Linear (lane-padded)
    o_ref  : (TB, 128)                      lane-dense output block
    """
    f32 = jnp.float32

    h = jnp.dot(x_ref[...], w1_ref[...], preferred_element_type=f32)
    h = jnp.maximum(h + b1_ref[...], 0.0)                     # (TB, P1)

    h = jnp.dot(h.astype(w2_ref.dtype), w2_ref[...], preferred_element_type=f32)
    h = jnp.maximum(h + b2_ref[...], 0.0)                     # (TB, P2)

    h = jnp.dot(h.astype(w3_ref.dtype), w3_ref[...], preferred_element_type=f32)
    h = jnp.maximum(h + b3_ref[...], 0.0)                     # (TB, P3)

    out = jnp.dot(h.astype(wl_ref.dtype), wl_ref[...], preferred_element_type=f32)
    o_ref[...] = (out + bl_ref[...]).astype(o_ref.dtype)      # (TB, 128)


# --------------------------------------------------------------------------- #
# One-time parameter preparation (hoisted out of the per-call path).
# --------------------------------------------------------------------------- #
def prepare_params(params, *, seq_len, dot_dtype=jnp.float32):
    """Fold conv structure (stride-2, zero-pad, taps) into dense matmul weights."""
    conv1_w = np.asarray(params["conv1_w"], np.float32)   # (C, 1, 5)
    conv1_b = np.asarray(params["conv1_b"], np.float32)   # (C,)
    conv2_w = np.asarray(params["conv2_w"], np.float32)   # (C, C, 3)
    conv2_b = np.asarray(params["conv2_b"], np.float32)
    conv3_w = np.asarray(params["conv3_w"], np.float32)   # (C, C, 3)
    conv3_b = np.asarray(params["conv3_b"], np.float32)
    lin_w = np.asarray(params["lin_w"], np.float32)        # (OUT, C*L3)
    lin_b = np.asarray(params["lin_b"], np.float32)        # (OUT,)

    L = seq_len
    C, _, K1 = conv1_w.shape
    OUT = lin_w.shape[0]
    assert OUT <= OUT_LANES

    L1 = _conv_out_len(L, K1, 2, 1)
    L2 = _conv_out_len(L1, 3, 2, 1)
    L3 = _conv_out_len(L2, 3, 2, 1)
    assert lin_w.shape[1] == C * L3, "linear_in must equal channels * L3"

    # Lane-pad every intermediate width to a multiple of 128.
    P1 = _round_up(L1 * C, 128)
    P2 = _round_up(L2 * C, 128)
    P3 = _round_up(L3 * C, 128)

    # conv1 (1 -> C): W1[j, i*C + c] = conv1_w[c, 0, k] where j = 2*i + k - 1.
    W1 = np.zeros((L, P1), np.float32)
    b1 = np.zeros((1, P1), np.float32)
    for i in range(L1):
        b1[0, i * C:(i + 1) * C] = conv1_b
        for k in range(K1):
            j = 2 * i + k - 1
            if 0 <= j < L:
                W1[j, i * C:(i + 1) * C] = conv1_w[:, 0, k]

    # conv (C -> C): W[j*C + ci, i*C + co] = w[co, ci, k] where j = 2*i + k - 1.
    def toeplitz(w, b, l_in, l_out, p_in, p_out):
        co, ci, kk = w.shape
        W = np.zeros((p_in, p_out), np.float32)
        bf = np.zeros((1, p_out), np.float32)
        for i in range(l_out):
            bf[0, i * co:(i + 1) * co] = b
            for k in range(kk):
                j = 2 * i + k - 1
                if 0 <= j < l_in:
                    W[j * ci:(j + 1) * ci, i * co:(i + 1) * co] = w[:, :, k].T
        return W, bf

    W2, b2 = toeplitz(conv2_w, conv2_b, L1, L2, P1, P2)
    W3, b3 = toeplitz(conv3_w, conv3_b, L2, L3, P2, P3)

    # flatten (channel-major, like torch .view) + Linear:
    # h3 in-kernel layout is position-major (l*C + c); torch index is c*L3 + l.
    WL = np.zeros((P3, OUT_LANES), np.float32)
    bl = np.zeros((1, OUT_LANES), np.float32)
    bl[0, :OUT] = lin_b
    for l in range(L3):
        for c in range(C):
            WL[l * C + c, :OUT] = lin_w[:, c * L3 + l]

    return {
        "w1": jnp.asarray(W1, dot_dtype), "b1": jnp.asarray(b1, jnp.float32),
        "w2": jnp.asarray(W2, dot_dtype), "b2": jnp.asarray(b2, jnp.float32),
        "w3": jnp.asarray(W3, dot_dtype), "b3": jnp.asarray(b3, jnp.float32),
        "wl": jnp.asarray(WL, dot_dtype), "bl": jnp.asarray(bl, jnp.float32),
        "out_size": OUT,     # python int; keep prep closed-over (not a jit arg)
    }


# --------------------------------------------------------------------------- #
# Forward wrapper.
# --------------------------------------------------------------------------- #
def conv_base_forward(x, prep, *, block_batch=128):
    """ConvBase forward.  x: (..., L) float.  Returns (B, output_size)."""
    dot_dtype = prep["w1"].dtype
    L = prep["w1"].shape[0]
    P1 = prep["w1"].shape[1]
    P2 = prep["w2"].shape[1]
    P3 = prep["w3"].shape[1]
    OUT = prep["out_size"]

    x = jnp.asarray(x, jnp.float32).reshape(-1, L)   # mirrors x.view(-1, 1, L)
    B = x.shape[0]

    TB = block_batch
    assert TB % 8 == 0, "block_batch must be a multiple of 8 (sublane tile)"
    num_blocks = -(-B // TB)
    if num_blocks > 1 and num_blocks % 2:
        num_blocks += 1          # even block count: balanced over v7x's 2 TCs
    Bp = num_blocks * TB

    xp = jnp.pad(x, ((0, Bp - B), (0, 0))).astype(dot_dtype)

    full = lambda s: (0, 0)      # resident constant blocks (DMA'd once)

    out = pl.pallas_call(
        _conv_base_kernel,
        out_shape=jax.ShapeDtypeStruct((Bp, OUT_LANES), jnp.float32),
        grid_spec=pltpu.PrefetchScalarGridSpec(
            num_scalar_prefetch=0,
            grid=(num_blocks,),
            in_specs=[
                pl.BlockSpec((TB, L), lambda s: (s, 0)),          # raw x block
                pl.BlockSpec((L, P1), full),                      # W1
                pl.BlockSpec((1, P1), full),                      # b1
                pl.BlockSpec((P1, P2), full),                     # W2
                pl.BlockSpec((1, P2), full),                      # b2
                pl.BlockSpec((P2, P3), full),                     # W3
                pl.BlockSpec((1, P3), full),                      # b3
                pl.BlockSpec((P3, OUT_LANES), full),              # WL
                pl.BlockSpec((1, OUT_LANES), full),               # bl
            ],
            out_specs=pl.BlockSpec((TB, OUT_LANES), lambda s: (s, 0)),
        ),
        compiler_params=pltpu.CompilerParams(
            dimension_semantics=("parallel",)),
    )(xp, prep["w1"], prep["b1"], prep["w2"], prep["b2"],
      prep["w3"], prep["b3"], prep["wl"], prep["bl"])

    return out[:B, :OUT]


# --------------------------------------------------------------------------- #
# Pure-JAX reference and demo.
# --------------------------------------------------------------------------- #
def _reference_forward(x, params):
    """Pure-JAX reference mirroring the PyTorch module."""
    x = jnp.asarray(x, jnp.float32)
    B = x.shape[0]
    h = x.reshape(B, 1, -1)

    def conv(h, w, b, stride, pad):
        y = lax.conv_general_dilated(
            h, w, window_strides=(stride,), padding=[(pad, pad)],
            dimension_numbers=("NCH", "OIH", "NCH"))
        return jax.nn.relu(y + b.reshape(1, -1, 1))

    h = conv(h, params["conv1_w"], params["conv1_b"], 2, 1)
    h = conv(h, params["conv2_w"], params["conv2_b"], 2, 1)
    h = conv(h, params["conv3_w"], params["conv3_b"], 2, 1)
    flat = h.reshape(B, -1)                       # channel-major, like torch .view
    return flat @ params["lin_w"].T + params["lin_b"]


def init_params(key, *, channels=25, output_size=8, linear_in=125):
    ks = jax.random.split(key, 8)
    s = 0.1
    return {
        "conv1_w": s * jax.random.normal(ks[0], (channels, 1, 5), jnp.float32),
        "conv1_b": s * jax.random.normal(ks[1], (channels,), jnp.float32),
        "conv2_w": s * jax.random.normal(ks[2], (channels, channels, 3), jnp.float32),
        "conv2_b": s * jax.random.normal(ks[3], (channels,), jnp.float32),
        "conv3_w": s * jax.random.normal(ks[4], (channels, channels, 3), jnp.float32),
        "conv3_b": s * jax.random.normal(ks[5], (channels,), jnp.float32),
        "lin_w": s * jax.random.normal(ks[6], (output_size, linear_in), jnp.float32),
        "lin_b": s * jax.random.normal(ks[7], (output_size,), jnp.float32),
    }


if __name__ == "__main__":
    # ConvBase defaults: channels=25, linear_in=125  =>  L=40 gives L3=5, 25*5=125.
    B, L = 200, 40
    CHANNELS, OUT = 25, 8
    L1 = _conv_out_len(L, 5, 2, 1)
    L2 = _conv_out_len(L1, 3, 2, 1)
    L3 = _conv_out_len(L2, 3, 2, 1)

    key = jax.random.PRNGKey(0)
    kx, kp = jax.random.split(key)
    x = jax.random.normal(kx, (B, L), jnp.float32)
    params = init_params(kp, channels=CHANNELS, output_size=OUT,
                         linear_in=CHANNELS * L3)

    # Layout work done once (Toeplitz weights, lane padding); use
    # dot_dtype=jnp.bfloat16 on v6e/v7x for MXU throughput (f32 demo for exactness).
    prep = prepare_params(params, seq_len=L, dot_dtype=jnp.float32)
    fwd = jax.jit(lambda xx: conv_base_forward(xx, prep, block_batch=128))

    y = jax.block_until_ready(fwd(x))

    y_ref = _reference_forward(x, params)
    assert y.shape == (B, OUT)
    err = float(jnp.max(jnp.abs(y - y_ref)))
    assert np.allclose(np.asarray(y), np.asarray(y_ref), atol=1e-4, rtol=1e-4), (
        f"mismatch: max abs err {err}")

    print("KERNEL_OK")
</pallas_src>

<mosaic_0001>
module attributes {stable_mosaic.version = 11 : i64} {
  func.func @_conv_base_kernel(%arg0: i32, %arg1: memref<128x40xf32, #tpu.memory_space<vmem>>, %arg2: memref<40x512xf32, #tpu.memory_space<vmem>>, %arg3: memref<1x512xf32, #tpu.memory_space<vmem>>, %arg4: memref<512x256xf32, #tpu.memory_space<vmem>>, %arg5: memref<1x256xf32, #tpu.memory_space<vmem>>, %arg6: memref<256x128xf32, #tpu.memory_space<vmem>>, %arg7: memref<1x128xf32, #tpu.memory_space<vmem>>, %arg8: memref<128x128xf32, #tpu.memory_space<vmem>>, %arg9: memref<1x128xf32, #tpu.memory_space<vmem>>, %arg10: memref<128x128xf32, #tpu.memory_space<vmem>>) attributes {dimension_semantics = [#tpu.dimension_semantics<parallel>], iteration_bounds = array<i64: 2>, scalar_prefetch = 0 : i64, scratch_operands = 0 : i64, tpu.core_type = #tpu.core_type<tc>, window_params = [{transform_indices = @transform_0, window_bounds = array<i64: 128, 40>}, {pipeline_mode = #tpu.pipeline_mode<synchronous>, transform_indices = @transform_1, window_bounds = array<i64: 40, 512>}, {pipeline_mode = #tpu.pipeline_mode<synchronous>, transform_indices = @transform_2, window_bounds = array<i64: 1, 512>}, {pipeline_mode = #tpu.pipeline_mode<synchronous>, transform_indices = @transform_3, window_bounds = array<i64: 512, 256>}, {pipeline_mode = #tpu.pipeline_mode<synchronous>, transform_indices = @transform_4, window_bounds = array<i64: 1, 256>}, {pipeline_mode = #tpu.pipeline_mode<synchronous>, transform_indices = @transform_5, window_bounds = array<i64: 256, 128>}, {pipeline_mode = #tpu.pipeline_mode<synchronous>, transform_indices = @transform_6, window_bounds = array<i64: 1, 128>}, {pipeline_mode = #tpu.pipeline_mode<synchronous>, transform_indices = @transform_7, window_bounds = array<i64: 128, 128>}, {pipeline_mode = #tpu.pipeline_mode<synchronous>, transform_indices = @transform_8, window_bounds = array<i64: 1, 128>}, {transform_indices = @transform_9, window_bounds = array<i64: 128, 128>}]} {
    %c0 = arith.constant 0 : index
    %c0_0 = arith.constant 0 : index
    %0 = vector.load %arg1[%c0, %c0_0] : memref<128x40xf32, #tpu.memory_space<vmem>>, vector<128x40xf32>
    %c0_1 = arith.constant 0 : index
    %c0_2 = arith.constant 0 : index
    %1 = vector.load %arg2[%c0_1, %c0_2] : memref<40x512xf32, #tpu.memory_space<vmem>>, vector<40x512xf32>
    %cst = arith.constant dense<0.000000e+00> : vector<128x512xf32>
    %2 = tpu.matmul %0, %1, %cst {dimension_numbers = #tpu.dot_dimension_numbers<[1], [0], [0], [1], [0, 0, 1, 1], [], []>} : vector<128x40xf32>, vector<40x512xf32>, vector<128x512xf32> -> vector<128x512xf32>
    %c0_3 = arith.constant 0 : index
    %c0_4 = arith.constant 0 : index
    %3 = vector.load %arg3[%c0_3, %c0_4] : memref<1x512xf32, #tpu.memory_space<vmem>>, vector<1x512xf32>
    %4 = vector.broadcast %3 : vector<1x512xf32> to vector<128x512xf32>
    %5 = arith.addf %2, %4 : vector<128x512xf32>
    %cst_5 = arith.constant 0.000000e+00 : f32
    %6 = vector.broadcast %cst_5 : f32 to vector<128x512xf32>
    %7 = arith.maximumf %5, %6 : vector<128x512xf32>
    %c0_6 = arith.constant 0 : index
    %c0_7 = arith.constant 0 : index
    %8 = vector.load %arg4[%c0_6, %c0_7] : memref<512x256xf32, #tpu.memory_space<vmem>>, vector<512x256xf32>
    %cst_8 = arith.constant dense<0.000000e+00> : vector<128x256xf32>
    %9 = tpu.matmul %7, %8, %cst_8 {dimension_numbers = #tpu.dot_dimension_numbers<[1], [0], [0], [1], [0, 0, 1, 1], [], []>} : vector<128x512xf32>, vector<512x256xf32>, vector<128x256xf32> -> vector<128x256xf32>
    %c0_9 = arith.constant 0 : index
    %c0_10 = arith.constant 0 : index
    %10 = vector.load %arg5[%c0_9, %c0_10] : memref<1x256xf32, #tpu.memory_space<vmem>>, vector<1x256xf32>
    %11 = vector.broadcast %10 : vector<1x256xf32> to vector<128x256xf32>
    %12 = arith.addf %9, %11 : vector<128x256xf32>
    %cst_11 = arith.constant 0.000000e+00 : f32
    %13 = vector.broadcast %cst_11 : f32 to vector<128x256xf32>
    %14 = arith.maximumf %12, %13 : vector<128x256xf32>
    %c0_12 = arith.constant 0 : index
    %c0_13 = arith.constant 0 : index
    %15 = vector.load %arg6[%c0_12, %c0_13] : memref<256x128xf32, #tpu.memory_space<vmem>>, vector<256x128xf32>
    %cst_14 = arith.constant dense<0.000000e+00> : vector<128x128xf32>
    %16 = tpu.matmul %14, %15, %cst_14 {dimension_numbers = #tpu.dot_dimension_numbers<[1], [0], [0], [1], [0, 0, 1, 1], [], []>} : vector<128x256xf32>, vector<256x128xf32>, vector<128x128xf32> -> vector<128x128xf32>
    %c0_15 = arith.constant 0 : index
    %c0_16 = arith.constant 0 : index
    %17 = vector.load %arg7[%c0_15, %c0_16] : memref<1x128xf32, #tpu.memory_space<vmem>>, vector<1x128xf32>
    %18 = vector.broadcast %17 : vector<1x128xf32> to vector<128x128xf32>
    %19 = arith.addf %16, %18 : vector<128x128xf32>
    %cst_17 = arith.constant 0.000000e+00 : f32
    %20 = vector.broadcast %cst_17 : f32 to vector<128x128xf32>
    %21 = arith.maximumf %19, %20 : vector<128x128xf32>
    %c0_18 = arith.constant 0 : index
    %c0_19 = arith.constant 0 : index
    %22 = vector.load %arg8[%c0_18, %c0_19] : memref<128x128xf32, #tpu.memory_space<vmem>>, vector<128x128xf32>
    %cst_20 = arith.constant dense<0.000000e+00> : vector<128x128xf32>
    %23 = tpu.matmul %21, %22, %cst_20 {dimension_numbers = #tpu.dot_dimension_numbers<[1], [0], [0], [1], [0, 0, 1, 1], [], []>} : vector<128x128xf32>, vector<128x128xf32>, vector<128x128xf32> -> vector<128x128xf32>
    %c0_21 = arith.constant 0 : index
    %c0_22 = arith.constant 0 : index
    %24 = vector.load %arg9[%c0_21, %c0_22] : memref<1x128xf32, #tpu.memory_space<vmem>>, vector<1x128xf32>
    %25 = vector.broadcast %24 : vector<1x128xf32> to vector<128x128xf32>
    %26 = arith.addf %23, %25 : vector<128x128xf32>
    %c0_23 = arith.constant 0 : index
    %c0_24 = arith.constant 0 : index
    %27 = vector.load %arg10[%c0_23, %c0_24] : memref<128x128xf32, #tpu.memory_space<vmem>>, vector<128x128xf32>
    tpu.vector_store %arg10[%c0_23, %c0_24], %26 {strides = array<i32>} : memref<128x128xf32, #tpu.memory_space<vmem>>, vector<128x128xf32>,
    return
  }
  func.func @transform_0(%arg0: i32) -> (i32, i32) {
    %c0_i32 = arith.constant 0 : i32
    %c0_i32_0 = arith.constant 0 : i32
    return %arg0, %c0_i32 : i32, i32
  }
  func.func @transform_1(%arg0: i32) -> (i32, i32) {
    %c0_i32 = arith.constant 0 : i32
    %c0_i32_0 = arith.constant 0 : i32
    %c0_i32_1 = arith.constant 0 : i32
    return %c0_i32, %c0_i32_0 : i32, i32
  }
  func.func @transform_2(%arg0: i32) -> (i32, i32) {
    %c0_i32 = arith.constant 0 : i32
    %c0_i32_0 = arith.constant 0 : i32
    %c0_i32_1 = arith.constant 0 : i32
    return %c0_i32, %c0_i32_0 : i32, i32
  }
  func.func @transform_3(%arg0: i32) -> (i32, i32) {
    %c0_i32 = arith.constant 0 : i32
    %c0_i32_0 = arith.constant 0 : i32
    %c0_i32_1 = arith.constant 0 : i32
    return %c0_i32, %c0_i32_0 : i32, i32
  }
  func.func @transform_4(%arg0: i32) -> (i32, i32) {
    %c0_i32 = arith.constant 0 : i32
    %c0_i32_0 = arith.constant 0 : i32
    %c0_i32_1 = arith.constant 0 : i32
    return %c0_i32, %c0_i32_0 : i32, i32
  }
  func.func @transform_5(%arg0: i32) -> (i32, i32) {
    %c0_i32 = arith.constant 0 : i32
    %c0_i32_0 = arith.constant 0 : i32
    %c0_i32_1 = arith.constant 0 : i32
    return %c0_i32, %c0_i32_0 : i32, i32
  }
  func.func @transform_6(%arg0: i32) -> (i32, i32) {
    %c0_i32 = arith.constant 0 : i32
    %c0_i32_0 = arith.constant 0 : i32
    %c0_i32_1 = arith.constant 0 : i32
    return %c0_i32, %c0_i32_0 : i32, i32
  }
  func.func @transform_7(%arg0: i32) -> (i32, i32) {
    %c0_i32 = arith.constant 0 : i32
    %c0_i32_0 = arith.constant 0 : i32
    %c0_i32_1 = arith.constant 0 : i32
    return %c0_i32, %c0_i32_0 : i32, i32
  }
  func.func @transform_8(%arg0: i32) -> (i32, i32) {
    %c0_i32 = arith.constant 0 : i32
    %c0_i32_0 = arith.constant 0 : i32
    %c0_i32_1 = arith.constant 0 : i32
    return %c0_i32, %c0_i32_0 : i32, i32
  }
  func.func @transform_9(%arg0: i32) -> (i32, i32) {
    %c0_i32 = arith.constant 0 : i32
    %c0_i32_0 = arith.constant 0 : i32
    return %arg0, %c0_i32 : i32, i32
  }
}

</mosaic_0001>

<llo_original>
// kernel: _lambda_.1
$region0: #{_lambda_.1}
  #allocation0 [shape = 'u32[]', space=smem, size = 0x4, offset = 0x4, fixed_abs, tag = 'smem constant byte address 0x4 - core index']
  #allocation1 [shape = 'u32[72,128]{1,0:T(1,128)}', space=vmem, size = 0x9000, scoped, tag = 'internal scratch']
  %s0 = inlined_call_operand.vmem [shape: f32[256,40], index: 0, kind: input, shape index: {}]
  %s1 = inlined_call_operand.vmem [shape: f32[40,512], index: 1, kind: input, shape index: {}]
  %s2 = inlined_call_operand.vmem [shape: f32[1,512], index: 2, kind: input, shape index: {}]
  %s3 = inlined_call_operand.hbm [shape: f32[512,256], index: 3, kind: input, shape index: {}]
  %s4 = inlined_call_operand.vmem [shape: f32[1,256], index: 4, kind: input, shape index: {}]
  %s5 = inlined_call_operand.vmem [shape: f32[256,128], index: 5, kind: input, shape index: {}]
  %s6 = inlined_call_operand.vmem [shape: f32[1,128], index: 6, kind: input, shape index: {}]
  %s7 = inlined_call_operand.vmem [shape: f32[128,128], index: 7, kind: input, shape index: {}]
  %s8 = inlined_call_operand.vmem [shape: f32[1,128], index: 8, kind: input, shape index: {}]
  %s9 = inlined_call_operand.vmem [shape: f32[256,128], index: 9, kind: output, shape index: {}]
  %s10 = sld [smem:[#allocation0]]
  $region73: #{_lambda_.1} parent=0
    _
  %s12 = ssub.s32 1, %s10
  %s13 = scalar_select 0, %s12, %s10
  $region1: #{_lambda_.1} parent=0
    #allocation2 [shape = 'u8[524288]{0}', space=vmem, size = 0x80000, scoped, tag = 'input window, operand 3, single buffered']
    #allocation3 [shape = 's32[2]{0}', space=sflag, size = 0x8, scoped, tag = 'scoped memory for _lambda_.1']
    %14 = vsyncpa [#allocation3], 0
    loop: start=0, step=1, limit=4
    $region2: #{_lambda_.1} parent=1 // loop_pre_header
      _
    $region3: #{_lambda_.1} parent=1 // loop_header
      %s16 = sphi 0, %s20
      %p17 = scmp.ge.s32.totalorder %s16, 4
      %s26 = sphi 0, %s28
      %s29 = sphi 0, %s26
      %s30 = sphi 0, %s29
      %s46 = sphi 0, %s30
      %s50 = sphi 0, %s50
      %s52 = sphi 0, %s50
      %s53 = sphi 0, %s52
      %s67 = sphi 0, %s53
      %s71 = sphi 0, %s71
      %s73 = sphi 0, %s71
      %s74 = sphi 0, %s73
      %s88 = sphi 0, %s74
      %s92 = sphi 0, %s92
      %s94 = sphi 0, %s92
      %s95 = sphi 0, %s94
      %s109 = sphi 0, %s95
      %s113 = sphi 0, %s113
      %s115 = sphi 0, %s113
      %s116 = sphi 0, %s115
      %s130 = sphi 0, %s116
      %s134 = sphi 0, %s134
      %s136 = sphi 0, %s134
      %s137 = sphi 0, %s136
      %s151 = sphi 0, %s137
      %s155 = sphi 0, %s155
      %s157 = sphi 0, %s155
      %s158 = sphi 0, %s157
      %s172 = sphi 0, %s158
      %s176 = sphi 0, %s176
      %s178 = sphi 0, %s176
      %s179 = sphi 0, %s178
      %s193 = sphi 0, %s179
      %s197 = sphi 0, %s197
      %s199 = sphi 0, %s197
      %s200 = sphi 0, %s199
      %s214 = sphi 0, %s200
      %s220 = sphi 0, %s222
      %s223 = sphi 0, %s220
      %s224 = sphi 0, %s223
      %s240 = sphi 0, %s224
    $region4: #{_lambda_.1} parent=1 // loop_header_branch
      %19 = sbr.rel (%p17) target = $region8
    $region5: #{_lambda_.1} parent=1 // loop_body
      %s21 = ssub.s32 %s16, 1
      %s22 = ssub.s32 %s16, 2
      %s23 = sadd.s32 %s16, 1
      %s24 = ssub.s32 %s16, %s23
      %p25 = scmp.eq.s32.totalorder %s24, 0
      %s27 = sadd.s32 %s26, 1
      %s28 = scalar_select %p25, %s26, %s27
      %p31 = pneg %p25
      %p32 = scmp.eq.s32.totalorder %s16, 1
      %p33 = por %p31, %p32
      %p34 = scmp.ne.s32.totalorder %s26, %s29
      %p35 = scmp.eq.s32.totalorder %s16, 0
      %p36 = por %p34, %p35
      %p37 = scmp.ne.s32.totalorder %s26, %s29
      %p38 = scmp.eq.s32.totalorder %s21, 1
      %p39 = por %p37, %p38
      %p40 = scmp.ne.s32.totalorder %s29, %s30
      %p41 = scmp.eq.s32.totalorder %s21, 0
      %p42 = por %p40, %p41
      %p43 = scmp.ne.s32.totalorder %s29, %s30
      %p44 = scmp.eq.s32.totalorder %s22, 1
      %p45 = por %p43, %p44
      %p47 = scmp.ne.s32.totalorder %s30, %s46
      %p48 = scmp.eq.s32.totalorder %s22, 0
      %p49 = por %p47, %p48
      %s51 = sadd.s32 %s50, 1
      %p54 = scmp.eq.s32.totalorder %s16, 1
      %p55 = scmp.ne.s32.totalorder %s50, %s52
      %p56 = scmp.eq.s32.totalorder %s16, 0
      %p57 = por %p55, %p56
      %p58 = scmp.ne.s32.totalorder %s50, %s52
      %p59 = scmp.eq.s32.totalorder %s21, 1
      %p60 = por %p58, %p59
      %p61 = scmp.ne.s32.totalorder %s52, %s53
      %p62 = scmp.eq.s32.totalorder %s21, 0
      %p63 = por %p61, %p62
      %p64 = scmp.ne.s32.totalorder %s52, %s53
      %p65 = scmp.eq.s32.totalorder %s22, 1
      %p66 = por %p64, %p65
      %p68 = scmp.ne.s32.totalorder %s53, %s67
      %p69 = scmp.eq.s32.totalorder %s22, 0
      %p70 = por %p68, %p69
      %s72 = sadd.s32 %s71, 1
      %p75 = scmp.eq.s32.totalorder %s16, 1
      %p76 = scmp.ne.s32.totalorder %s71, %s73
      %p77 = scmp.eq.s32.totalorder %s16, 0
      %p78 = por %p76, %p77
      %p79 = scmp.ne.s32.totalorder %s71, %s73
      %p80 = scmp.eq.s32.totalorder %s21, 1
      %p81 = por %p79, %p80
      %p82 = scmp.ne.s32.totalorder %s73, %s74
      %p83 = scmp.eq.s32.totalorder %s21, 0
      %p84 = por %p82, %p83
      %p85 = scmp.ne.s32.totalorder %s73, %s74
      %p86 = scmp.eq.s32.totalorder %s22, 1
      %p87 = por %p85, %p86
      %p89 = scmp.ne.s32.totalorder %s74, %s88
      %p90 = scmp.eq.s32.totalorder %s22, 0
      %p91 = por %p89, %p90
      %s93 = sadd.s32 %s92, 1
      %p96 = scmp.eq.s32.totalorder %s16, 1
      %p97 = scmp.ne.s32.totalorder %s92, %s94
      %p98 = scmp.eq.s32.totalorder %s16, 0
      %p99 = por %p97, %p98
      %p100 = scmp.ne.s32.totalorder %s92, %s94
      %p101 = scmp.eq.s32.totalorder %s21, 1
      %p102 = por %p100, %p101
      %p103 = scmp.ne.s32.totalorder %s94, %s95
      %p104 = scmp.eq.s32.totalorder %s21, 0
      %p105 = por %p103, %p104
      %p106 = scmp.ne.s32.totalorder %s94, %s95
      %p107 = scmp.eq.s32.totalorder %s22, 1
      %p108 = por %p106, %p107
      %p110 = scmp.ne.s32.totalorder %s95, %s109
      %p111 = scmp.eq.s32.totalorder %s22, 0
      %p112 = por %p110, %p111
      %s114 = sadd.s32 %s113, 1
      %p117 = scmp.eq.s32.totalorder %s16, 1
      %p118 = scmp.ne.s32.totalorder %s113, %s115
      %p119 = scmp.eq.s32.totalorder %s16, 0
      %p120 = por %p118, %p119
      %p121 = scmp.ne.s32.totalorder %s113, %s115
      %p122 = scmp.eq.s32.totalorder %s21, 1
      %p123 = por %p121, %p122
      %p124 = scmp.ne.s32.totalorder %s115, %s116
      %p125 = scmp.eq.s32.totalorder %s21, 0
      %p126 = por %p124, %p125
      %p127 = scmp.ne.s32.totalorder %s115, %s116
      %p128 = scmp.eq.s32.totalorder %s22, 1
      %p129 = por %p127, %p128
      %p131 = scmp.ne.s32.totalorder %s116, %s130
      %p132 = scmp.eq.s32.totalorder %s22, 0
      %p133 = por %p131, %p132
      %s135 = sadd.s32 %s134, 1
      %p138 = scmp.eq.s32.totalorder %s16, 1
      %p139 = scmp.ne.s32.totalorder %s134, %s136
      %p140 = scmp.eq.s32.totalorder %s16, 0
      %p141 = por %p139, %p140
      %p142 = scmp.ne.s32.totalorder %s134, %s136
      %p143 = scmp.eq.s32.totalorder %s21, 1
      %p144 = por %p142, %p143
      %p145 = scmp.ne.s32.totalorder %s136, %s137
      %p146 = scmp.eq.s32.totalorder %s21, 0
      %p147 = por %p145, %p146
      %p148 = scmp.ne.s32.totalorder %s136, %s137
      %p149 = scmp.eq.s32.totalorder %s22, 1
      %p150 = por %p148, %p149
      %p152 = scmp.ne.s32.totalorder %s137, %s151
      %p153 = scmp.eq.s32.totalorder %s22, 0
      %p154 = por %p152, %p153
      %s156 = sadd.s32 %s155, 1
      %p159 = scmp.eq.s32.totalorder %s16, 1
      %p160 = scmp.ne.s32.totalorder %s155, %s157
      %p161 = scmp.eq.s32.totalorder %s16, 0
      %p162 = por %p160, %p161
      %p163 = scmp.ne.s32.totalorder %s155, %s157
      %p164 = scmp.eq.s32.totalorder %s21, 1
      %p165 = por %p163, %p164
      %p166 = scmp.ne.s32.totalorder %s157, %s158
      %p167 = scmp.eq.s32.totalorder %s21, 0
      %p168 = por %p166, %p167
      %p169 = scmp.ne.s32.totalorder %s157, %s158
      %p170 = scmp.eq.s32.totalorder %s22, 1
      %p171 = por %p169, %p170
      %p173 = scmp.ne.s32.totalorder %s158, %s172
      %p174 = scmp.eq.s32.totalorder %s22, 0
      %p175 = por %p173, %p174
      %s177 = sadd.s32 %s176, 1
      %p180 = scmp.eq.s32.totalorder %s16, 1
      %p181 = scmp.ne.s32.totalorder %s176, %s178
      %p182 = scmp.eq.s32.totalorder %s16, 0
      %p183 = por %p181, %p182
      %p184 = scmp.ne.s32.totalorder %s176, %s178
      %p185 = scmp.eq.s32.totalorder %s21, 1
      %p186 = por %p184, %p185
      %p187 = scmp.ne.s32.totalorder %s178, %s179
      %p188 = scmp.eq.s32.totalorder %s21, 0
      %p189 = por %p187, %p188
      %p190 = scmp.ne.s32.totalorder %s178, %s179
      %p191 = scmp.eq.s32.totalorder %s22, 1
      %p192 = por %p190, %p191
      %p194 = scmp.ne.s32.totalorder %s179, %s193
      %p195 = scmp.eq.s32.totalorder %s22, 0
      %p196 = por %p194, %p195
      %s198 = sadd.s32 %s197, 1
      %p201 = scmp.eq.s32.totalorder %s16, 1
      %p202 = scmp.ne.s32.totalorder %s197, %s199
      %p203 = scmp.eq.s32.totalorder %s16, 0
      %p204 = por %p202, %p203
      %p205 = scmp.ne.s32.totalorder %s197, %s199
      %p206 = scmp.eq.s32.totalorder %s21, 1
      %p207 = por %p205, %p206
      %p208 = scmp.ne.s32.totalorder %s199, %s200
      %p209 = scmp.eq.s32.totalorder %s21, 0
      %p210 = por %p208, %p209
      %p211 = scmp.ne.s32.totalorder %s199, %s200
      %p212 = scmp.eq.s32.totalorder %s22, 1
      %p213 = por %p211, %p212
      %p215 = scmp.ne.s32.totalorder %s200, %s214
      %p216 = scmp.eq.s32.totalorder %s22, 0
      %p217 = por %p215, %p216
      %s218 = ssub.s32 %s16, %s23
      %p219 = scmp.eq.s32.totalorder %s218, 0
      %s221 = sadd.s32 %s220, 1
      %s222 = scalar_select %p219, %s220, %s221
      %p225 = pneg %p219
      %p226 = scmp.eq.s32.totalorder %s16, 1
      %p227 = por %p225, %p226
      %p228 = scmp.ne.s32.totalorder %s220, %s223
      %p229 = scmp.eq.s32.totalorder %s16, 0
      %p230 = por %p228, %p229
      %p231 = scmp.ne.s32.totalorder %s220, %s223
      %p232 = scmp.eq.s32.totalorder %s21, 1
      %p233 = por %p231, %p232
      %p234 = scmp.ne.s32.totalorder %s223, %s224
      %p235 = scmp.eq.s32.totalorder %s21, 0
      %p236 = por %p234, %p235
      %p237 = scmp.ne.s32.totalorder %s223, %s224
      %p238 = scmp.eq.s32.totalorder %s22, 1
      %p239 = por %p237, %p238
      %p241 = scmp.ne.s32.totalorder %s224, %s240
      %p242 = scmp.eq.s32.totalorder %s22, 0
      %p243 = por %p241, %p242
      %p244 = scmp.le.s32.totalorder 1, %s16
      %p245 = scmp.lt.s32.totalorder %s16, 3
      %p246 = pnand %p244, %p245
      %p247 = pneg %p246
      // Predicated region
      $region9: #{_lambda_.1} parent=5 // pred_check
        _
      $region10: #{_lambda_.1} parent=5 // pred_check_branch
        %249 = sbr.rel (%p246) target = $region12
      $region11: #{_lambda_.1} parent=5 // pred_region
        %s250 = ssub.s32 %s16, 1
        // Predicated region
        $region13: #{_lambda_.1} parent=11 // pred_check
          %p251 = pneg %p63
        $region14: #{_lambda_.1} parent=11 // pred_check_branch
          %253 = sbr.rel (%p251) target = $region16
        $region15: #{_lambda_.1} parent=11 // pred_region
          _
        $region16: #{_lambda_.1} parent=11 // pred_fallthru
          _
        // Predicated region
        $region17: #{_lambda_.1} parent=11 // pred_check
          %p254 = pneg %p84
        $region18: #{_lambda_.1} parent=11 // pred_check_branch
          %256 = sbr.rel (%p254) target = $region20
        $region19: #{_lambda_.1} parent=11 // pred_region
          _
        $region20: #{_lambda_.1} parent=11 // pred_fallthru
          _
        // Predicated region
        $region21: #{_lambda_.1} parent=11 // pred_check
          %p257 = pneg %p105
        $region22: #{_lambda_.1} parent=11 // pred_check_branch
          %259 = sbr.rel (%p257) target = $region24
        $region23: #{_lambda_.1} parent=11 // pred_region
          %261 = vsyncadd [#allocation3], 0
          %s262 = sshll.u32 %s3, 4
          %s263 = int_to_ptr.hbm [resolvable:$true] %s262
          %s264 = sshll.u32 [#allocation2], 4
          %s265 = int_to_ptr.vmem [resolvable:$true] %s264
          %270 = dma.hbm_to_vmem [thread:$0]  %s263, 16384, %s265, [#allocation3], 256, 256, 16
        $region24: #{_lambda_.1} parent=11 // pred_fallthru
          _
        // Predicated region
        $region25: #{_lambda_.1} parent=11 // pred_check
          %p271 = pneg %p126
        $region26: #{_lambda_.1} parent=11 // pred_check_branch
          %273 = sbr.rel (%p271) target = $region28
        $region27: #{_lambda_.1} parent=11 // pred_region
          _
        $region28: #{_lambda_.1} parent=11 // pred_fallthru
          _
        // Predicated region
        $region29: #{_lambda_.1} parent=11 // pred_check
          %p274 = pneg %p147
        $region30: #{_lambda_.1} parent=11 // pred_check_branch
          %276 = sbr.rel (%p274) target = $region32
        $region31: #{_lambda_.1} parent=11 // pred_region
          _
        $region32: #{_lambda_.1} parent=11 // pred_fallthru
          _
        // Predicated region
        $region33: #{_lambda_.1} parent=11 // pred_check
          %p277 = pneg %p168
        $region34: #{_lambda_.1} parent=11 // pred_check_branch
          %279 = sbr.rel (%p277) target = $region36
        $region35: #{_lambda_.1} parent=11 // pred_region
          _
        $region36: #{_lambda_.1} parent=11 // pred_fallthru
          _
        // Predicated region
        $region37: #{_lambda_.1} parent=11 // pred_check
          %p280 = pneg %p189
        $region38: #{_lambda_.1} parent=11 // pred_check_branch
          %282 = sbr.rel (%p280) target = $region40
        $region39: #{_lambda_.1} parent=11 // pred_region
          _
        $region40: #{_lambda_.1} parent=11 // pred_fallthru
          _
        // Predicated region
        $region41: #{_lambda_.1} parent=11 // pred_check
          %p283 = pneg %p210
        $region42: #{_lambda_.1} parent=11 // pred_check_branch
          %285 = sbr.rel (%p283) target = $region44
        $region43: #{_lambda_.1} parent=11 // pred_region
          _
        $region44: #{_lambda_.1} parent=11 // pred_fallthru
          _
      $region12: #{_lambda_.1} parent=5 // pred_fallthru
        _
      %p286 = scmp.lt.s32.totalorder %s16, 2
      // Predicated region
      $region45: #{_lambda_.1} parent=5 // pred_check
        %p287 = pneg %p286
      $region46: #{_lambda_.1} parent=5 // pred_check_branch
        %289 = sbr.rel (%p287) target = $region48
      $region47: #{_lambda_.1} parent=5 // pred_region
        // Predicated region
        $region49: #{_lambda_.1} parent=47 // pred_check
          %p290 = pneg %p36
        $region50: #{_lambda_.1} parent=47 // pred_check_branch
          %292 = sbr.rel (%p290) target = $region52
        $region51: #{_lambda_.1} parent=47 // pred_region
          %s293 = smul.u32 16, %s16
          %p294 = scmp.lt.s32.totalorder %s293, 31
          %s295 = scalar_select %p294, %s293, 31
          %s296 = smul.addr %s295, 8
          %s297 = scalar_lea.vmem %s0, %s296
          %s298 = smul.u32 16, %s16
        $region52: #{_lambda_.1} parent=47 // pred_fallthru
          _
      $region48: #{_lambda_.1} parent=5 // pred_fallthru
        _
      %p299 = scmp.le.s32.totalorder 1, %s16
      %p300 = scmp.lt.s32.totalorder %s16, 3
      %p301 = pnand %p299, %p300
      %p302 = pneg %p301
      // Predicated region
      $region53: #{_lambda_.1} parent=5 // pred_check
        _
      $region54: #{_lambda_.1} parent=5 // pred_check_branch
        %304 = sbr.rel (%p301) target = $region56
      $region55: #{_lambda_.1} parent=5 // pred_region
        %s305 = ssub.s32 %s16, 1
        // Predicated region
        $region57: #{_lambda_.1} parent=55 // pred_check
          %p306 = pneg %p105
        $region58: #{_lambda_.1} parent=55 // pred_check_branch
          %308 = sbr.rel (%p306) target = $region60
        $region59: #{_lambda_.1} parent=55 // pred_region
          %310 = dma.done [#allocation3], 16384
        $region60: #{_lambda_.1} parent=55 // pred_fallthru
          _
        %s311 = smul.u32 16, %s21
        %p312 = scmp.lt.s32.totalorder %s311, 31
        %s313 = scalar_select %p312, %s311, 31
        %s314 = smul.addr %s313, 8
        %s315 = scalar_lea.vmem %s0, %s314
        %p316 = pneg %p42
        %p317 = pneg %p39
        %p318 = pneg %p63
        %p319 = pneg %p60
        %p320 = pneg %p84
        %p321 = pneg %p81
        %p322 = pneg %p105
        %p323 = pneg %p102
        %p324 = pneg %p126
        %p325 = pneg %p123
        %p326 = pneg %p147
        %p327 = pneg %p144
        %p328 = pneg %p168
        %p329 = pneg %p165
        %p330 = pneg %p189
        %p331 = pneg %p186
        %p332 = pneg %p210
        %p333 = pneg %p207
        %p334 = pneg %p236
        %p335 = pneg %p233
        %s336 = smul.u32 16, %s21
        %p337 = scmp.lt.s32.totalorder %s336, 31
        %s338 = scalar_select %p337, %s336, 31
        %s339 = smul.addr %s338, 8
        %s340 = scalar_lea.vmem %s9, %s339
        %s341 = smul.u32 16, %s21
        %p342 = scmp.lt.s32.totalorder %s341, 31
        %s343 = scalar_select %p342, %s341, 31
        %s344 = smul.addr %s343, 8
        %s345 = scalar_lea.vmem %s0, %s344
        %s346 = smul.u32 16, %s21
        %s347 = smul.u32 16, %s21
        %p348 = scmp.lt.s32.totalorder %s347, 31
        %s349 = scalar_select %p348, %s347, 31
        %s350 = smul.addr %s349, 8
        %s351 = scalar_lea.vmem %s9, %s350
        %s352 = smul.u32 16, %s21
        %v353 = vld [vmem:[%s345] sm:$0xff]
        %v354 = vld [vmem:[%s345 + $0x8] sm:$0xff]
        %v355 = vld [vmem:[%s345 + $0x10] sm:$0xff]
        %v356 = vld [vmem:[%s345 + $0x18] sm:$0xff]
        %v357 = vld [vmem:[%s345 + $0x20] sm:$0xff]
        %v358 = vld [vmem:[%s345 + $0x28] sm:$0xff]
        %v359 = vld [vmem:[%s345 + $0x30] sm:$0xff]
        %v360 = vld [vmem:[%s345 + $0x38] sm:$0xff]
        %v361 = vld [vmem:[%s345 + $0x40] sm:$0xff]
        %v362 = vld [vmem:[%s345 + $0x48] sm:$0xff]
        %v363 = vld [vmem:[%s345 + $0x50] sm:$0xff]
        %v364 = vld [vmem:[%s345 + $0x58] sm:$0xff]
        %v365 = vld [vmem:[%s345 + $0x60] sm:$0xff]
        %v366 = vld [vmem:[%s345 + $0x68] sm:$0xff]
        %v367 = vld [vmem:[%s345 + $0x70] sm:$0xff]
        %v368 = vld [vmem:[%s345 + $0x78] sm:$0xff]
        %v369 = vld [vmem:[%s1] sm:$0xff]
        %v370 = vld [vmem:[%s1 + $0x8] sm:$0xff]
        %v371 = vld [vmem:[%s1 + $0x10] sm:$0xff]
        %v372 = vld [vmem:[%s1 + $0x18] sm:$0xff]
        %v373 = vld [vmem:[%s1 + $0x20] sm:$0xff]
        %v374 = vld [vmem:[%s1 + $0x28] sm:$0xff]
        %v375 = vld [vmem:[%s1 + $0x30] sm:$0xff]
        %v376 = vld [vmem:[%s1 + $0x38] sm:$0xff]
        %v377 = vld [vmem:[%s1 + $0x40] sm:$0xff]
        %v378 = vld [vmem:[%s1 + $0x48] sm:$0xff]
        %v379 = vld [vmem:[%s1 + $0x50] sm:$0xff]
        %v380 = vld [vmem:[%s1 + $0x58] sm:$0xff]
        %v381 = vld [vmem:[%s1 + $0x60] sm:$0xff]
        %v382 = vld [vmem:[%s1 + $0x68] sm:$0xff]
        %v383 = vld [vmem:[%s1 + $0x70] sm:$0xff]
        %v384 = vld [vmem:[%s1 + $0x78] sm:$0xff]
        %v385 = vld [vmem:[%s1 + $0x80] sm:$0xff]
        %v386 = vld [vmem:[%s1 + $0x88] sm:$0xff]
        %v387 = vld [vmem:[%s1 + $0x90] sm:$0xff]
        %v388 = vld [vmem:[%s1 + $0x98] sm:$0xff]
        %v389 = vld [vmem:[%s2] sm:$0xf]
        %v391 = vperm.slane %v389, 0
        %v392 = vperm.slane %v389, 1
        %v393 = vperm.slane %v389, 2
        %v394 = vperm.slane %v389, 3
        %vm399 = vcmask 326656
        %v401 = vsel %vm399, %v353, 0
        %v404 = vsel %vm399, %v354, 0
        %v407 = vsel %vm399, %v355, 0
        %v410 = vsel %vm399, %v356, 0
        %v413 = vsel %vm399, %v357, 0
        %v416 = vsel %vm399, %v358, 0
        %v419 = vsel %vm399, %v359, 0
        %v422 = vsel %vm399, %v360, 0
        %v425 = vsel %vm399, %v361, 0
        %v428 = vsel %vm399, %v362, 0
        %v431 = vsel %vm399, %v363, 0
        %v434 = vsel %vm399, %v364, 0
        %v437 = vsel %vm399, %v365, 0
        %v440 = vsel %vm399, %v366, 0
        %v443 = vsel %vm399, %v367, 0
        %v446 = vsel %vm399, %v368, 0
        %448 = vmatpush.msra.mxu0 0.0
        %449 = vmatpush.msra.mxu0 0.0
        %450 = vmatpush.msra.mxu0 0.0
        %451 = vmatpush.msra.mxu0 0.0
        %452 = vmatpush.msra.mxu0 0.0
        %453 = vmatpush.msra.mxu0 0.0
        %454 = vmatpush.msra.mxu0 0.0
        %455 = vmatpush.msra.mxu0 0.0
        %456 = vmatpush.msra.mxu0 0.0
        %457 = vmatpush.msra.mxu0 0.0
        %458 = vmatpush.msra.mxu0 0.0
        %459 = vmatpush.msra.mxu0 %v385
        %460 = vmatpush.msra.mxu0 %v381
        %461 = vmatpush.msra.mxu0 %v377
        %462 = vmatpush.msra.mxu0 %v373
        %463 = vmatpush.msra.mxu0 %v369
        %464 = vmatmul.f32.gmra.mxu0 %v401
        %v465 = vpop.f32.mrf.mxu0
        %v466 = vadd.f32 %v391, %v465
        %467 = vmatmul.f32.gmra.mxu0 %v404
        %v468 = vpop.f32.mrf.mxu0
        %v469 = vadd.f32 %v391, %v468
        %470 = vmatmul.f32.gmra.mxu0 %v407
        %v471 = vpop.f32.mrf.mxu0
        %v472 = vadd.f32 %v391, %v471
        %473 = vmatmul.f32.gmra.mxu0 %v410
        %v474 = vpop.f32.mrf.mxu0
        %v475 = vadd.f32 %v391, %v474
        %476 = vmatmul.f32.gmra.mxu0 %v413
        %v477 = vpop.f32.mrf.mxu0
        %v478 = vadd.f32 %v391, %v477
        %479 = vmatmul.f32.gmra.mxu0 %v416
        %v480 = vpop.f32.mrf.mxu0
        %v481 = vadd.f32 %v391, %v480
        %482 = vmatmul.f32.gmra.mxu0 %v419
        %v483 = vpop.f32.mrf.mxu0
        %v484 = vadd.f32 %v391, %v483
        %485 = vmatmul.f32.gmra.mxu0 %v422
        %v486 = vpop.f32.mrf.mxu0
        %v487 = vadd.f32 %v391, %v486
        %488 = vmatmul.f32.gmra.mxu0 %v425
        %v489 = vpop.f32.mrf.mxu0
        %v490 = vadd.f32 %v391, %v489
        %491 = vmatmul.f32.gmra.mxu0 %v428
        %v492 = vpop.f32.mrf.mxu0
        %v493 = vadd.f32 %v391, %v492
        %494 = vmatmul.f32.gmra.mxu0 %v431
        %v495 = vpop.f32.mrf.mxu0
        %v496 = vadd.f32 %v391, %v495
        %497 = vmatmul.f32.gmra.mxu0 %v434
        %v498 = vpop.f32.mrf.mxu0
        %v499 = vadd.f32 %v391, %v498
        %500 = vmatmul.f32.gmra.mxu0 %v437
        %v501 = vpop.f32.mrf.mxu0
        %v502 = vadd.f32 %v391, %v501
        %503 = vmatmul.f32.gmra.mxu0 %v440
        %v504 = vpop.f32.mrf.mxu0
        %v505 = vadd.f32 %v391, %v504
        %506 = vmatmul.f32.gmra.mxu0 %v443
        %v507 = vpop.f32.mrf.mxu0
        %v508 = vadd.f32 %v391, %v507
        %509 = vmatmul.f32.gmra.mxu0 %v446
        %v510 = vpop.f32.mrf.mxu0
        %v511 = vadd.f32 %v391, %v510
        %512 = vdwg.mxu0
        %513 = vmatpush.msra.mxu0 0.0
        %514 = vmatpush.msra.mxu0 0.0
        %515 = vmatpush.msra.mxu0 0.0
        %516 = vmatpush.msra.mxu0 0.0
        %517 = vmatpush.msra.mxu0 0.0
        %518 = vmatpush.msra.mxu0 0.0
        %519 = vmatpush.msra.mxu0 0.0
        %520 = vmatpush.msra.mxu0 0.0
        %521 = vmatpush.msra.mxu0 0.0
        %522 = vmatpush.msra.mxu0 0.0
        %523 = vmatpush.msra.mxu0 0.0
        %524 = vmatpush.msra.mxu0 %v386
        %525 = vmatpush.msra.mxu0 %v382
        %526 = vmatpush.msra.mxu0 %v378
        %527 = vmatpush.msra.mxu0 %v374
        %528 = vmatpush.msra.mxu0 %v370
        %529 = vmatmul.f32.gmra.mxu0 %v401
        %v530 = vpop.f32.mrf.mxu0
        %v531 = vadd.f32 %v392, %v530
        %532 = vmatmul.f32.gmra.mxu0 %v404
        %v533 = vpop.f32.mrf.mxu0
        %v534 = vadd.f32 %v392, %v533
        %535 = vmatmul.f32.gmra.mxu0 %v407
        %v536 = vpop.f32.mrf.mxu0
        %v537 = vadd.f32 %v392, %v536
        %538 = vmatmul.f32.gmra.mxu0 %v410
        %v539 = vpop.f32.mrf.mxu0
        %v540 = vadd.f32 %v392, %v539
        %541 = vmatmul.f32.gmra.mxu0 %v413
        %v542 = vpop.f32.mrf.mxu0
        %v543 = vadd.f32 %v392, %v542
        %544 = vmatmul.f32.gmra.mxu0 %v416
        %v545 = vpop.f32.mrf.mxu0
        %v546 = vadd.f32 %v392, %v545
        %547 = vmatmul.f32.gmra.mxu0 %v419
        %v548 = vpop.f32.mrf.mxu0
        %v549 = vadd.f32 %v392, %v548
        %550 = vmatmul.f32.gmra.mxu0 %v422
        %v551 = vpop.f32.mrf.mxu0
        %v552 = vadd.f32 %v392, %v551
        %553 = vmatmul.f32.gmra.mxu0 %v425
        %v554 = vpop.f32.mrf.mxu0
        %v555 = vadd.f32 %v392, %v554
        %556 = vmatmul.f32.gmra.mxu0 %v428
        %v557 = vpop.f32.mrf.mxu0
        %v558 = vadd.f32 %v392, %v557
        %559 = vmatmul.f32.gmra.mxu0 %v431
        %v560 = vpop.f32.mrf.mxu0
        %v561 = vadd.f32 %v392, %v560
        %562 = vmatmul.f32.gmra.mxu0 %v434
        %v563 = vpop.f32.mrf.mxu0
        %v564 = vadd.f32 %v392, %v563
        %565 = vmatmul.f32.gmra.mxu0 %v437
        %v566 = vpop.f32.mrf.mxu0
        %v567 = vadd.f32 %v392, %v566
        %568 = vmatmul.f32.gmra.mxu0 %v440
        %v569 = vpop.f32.mrf.mxu0
        %v570 = vadd.f32 %v392, %v569
        %571 = vmatmul.f32.gmra.mxu0 %v443
        %v572 = vpop.f32.mrf.mxu0
        %v573 = vadd.f32 %v392, %v572
        %574 = vmatmul.f32.gmra.mxu0 %v446
        %v575 = vpop.f32.mrf.mxu0
        %v576 = vadd.f32 %v392, %v575
        %577 = vdwg.mxu0
        %578 = vmatpush.msra.mxu0 0.0
        %579 = vmatpush.msra.mxu0 0.0
        %580 = vmatpush.msra.mxu0 0.0
        %581 = vmatpush.msra.mxu0 0.0
        %582 = vmatpush.msra.mxu0 0.0
        %583 = vmatpush.msra.mxu0 0.0
        %584 = vmatpush.msra.mxu0 0.0
        %585 = vmatpush.msra.mxu0 0.0
        %586 = vmatpush.msra.mxu0 0.0
        %587 = vmatpush.msra.mxu0 0.0
        %588 = vmatpush.msra.mxu0 0.0
        %589 = vmatpush.msra.mxu0 %v387
        %590 = vmatpush.msra.mxu0 %v383
        %591 = vmatpush.msra.mxu0 %v379
        %592 = vmatpush.msra.mxu0 %v375
        %593 = vmatpush.msra.mxu0 %v371
        %594 = vmatmul.f32.gmra.mxu0 %v401
        %v595 = vpop.f32.mrf.mxu0
        %v596 = vadd.f32 %v393, %v595
        %597 = vmatmul.f32.gmra.mxu0 %v404
        %v598 = vpop.f32.mrf.mxu0
        %v599 = vadd.f32 %v393, %v598
        %600 = vmatmul.f32.gmra.mxu0 %v407
        %v601 = vpop.f32.mrf.mxu0
        %v602 = vadd.f32 %v393, %v601
        %603 = vmatmul.f32.gmra.mxu0 %v410
        %v604 = vpop.f32.mrf.mxu0
        %v605 = vadd.f32 %v393, %v604
        %606 = vmatmul.f32.gmra.mxu0 %v413
        %v607 = vpop.f32.mrf.mxu0
        %v608 = vadd.f32 %v393, %v607
        %609 = vmatmul.f32.gmra.mxu0 %v416
        %v610 = vpop.f32.mrf.mxu0
        %v611 = vadd.f32 %v393, %v610
        %612 = vmatmul.f32.gmra.mxu0 %v419
        %v613 = vpop.f32.mrf.mxu0
        %v614 = vadd.f32 %v393, %v613
        %615 = vmatmul.f32.gmra.mxu0 %v422
        %v616 = vpop.f32.mrf.mxu0
        %v617 = vadd.f32 %v393, %v616
        %618 = vmatmul.f32.gmra.mxu0 %v425
        %v619 = vpop.f32.mrf.mxu0
        %v620 = vadd.f32 %v393, %v619
        %621 = vmatmul.f32.gmra.mxu0 %v428
        %v622 = vpop.f32.mrf.mxu0
        %v623 = vadd.f32 %v393, %v622
        %624 = vmatmul.f32.gmra.mxu0 %v431
        %v625 = vpop.f32.mrf.mxu0
        %v626 = vadd.f32 %v393, %v625
        %627 = vmatmul.f32.gmra.mxu0 %v434
        %v628 = vpop.f32.mrf.mxu0
        %v629 = vadd.f32 %v393, %v628
        %630 = vmatmul.f32.gmra.mxu0 %v437
        %v631 = vpop.f32.mrf.mxu0
        %v632 = vadd.f32 %v393, %v631
        %633 = vmatmul.f32.gmra.mxu0 %v440
        %v634 = vpop.f32.mrf.mxu0
        %v635 = vadd.f32 %v393, %v634
        %636 = vmatmul.f32.gmra.mxu0 %v443
        %v637 = vpop.f32.mrf.mxu0
        %v638 = vadd.f32 %v393, %v637
        %639 = vmatmul.f32.gmra.mxu0 %v446
        %v640 = vpop.f32.mrf.mxu0
        %v641 = vadd.f32 %v393, %v640
        %642 = vdwg.mxu0
        %643 = vmatpush.msra.mxu0 0.0
        %644 = vmatpush.msra.mxu0 0.0
        %645 = vmatpush.msra.mxu0 0.0
        %646 = vmatpush.msra.mxu0 0.0
        %647 = vmatpush.msra.mxu0 0.0
        %648 = vmatpush.msra.mxu0 0.0
        %649 = vmatpush.msra.mxu0 0.0
        %650 = vmatpush.msra.mxu0 0.0
        %651 = vmatpush.msra.mxu0 0.0
        %652 = vmatpush.msra.mxu0 0.0
        %653 = vmatpush.msra.mxu0 0.0
        %654 = vmatpush.msra.mxu0 %v388
        %655 = vmatpush.msra.mxu0 %v384
        %656 = vmatpush.msra.mxu0 %v380
        %657 = vmatpush.msra.mxu0 %v376
        %658 = vmatpush.msra.mxu0 %v372
        %659 = vmatmul.f32.gmra.mxu0 %v401
        %v660 = vpop.f32.mrf.mxu0
        %v661 = vadd.f32 %v394, %v660
        %662 = vmatmul.f32.gmra.mxu0 %v404
        %v663 = vpop.f32.mrf.mxu0
        %v664 = vadd.f32 %v394, %v663
        %665 = vmatmul.f32.gmra.mxu0 %v407
        %v666 = vpop.f32.mrf.mxu0
        %v667 = vadd.f32 %v394, %v666
        %668 = vmatmul.f32.gmra.mxu0 %v410
        %v669 = vpop.f32.mrf.mxu0
        %v670 = vadd.f32 %v394, %v669
        %671 = vmatmul.f32.gmra.mxu0 %v413
        %v672 = vpop.f32.mrf.mxu0
        %v673 = vadd.f32 %v394, %v672
        %674 = vmatmul.f32.gmra.mxu0 %v416
        %v675 = vpop.f32.mrf.mxu0
        %v676 = vadd.f32 %v394, %v675
        %677 = vmatmul.f32.gmra.mxu0 %v419
        %v678 = vpop.f32.mrf.mxu0
        %v679 = vadd.f32 %v394, %v678
        %680 = vmatmul.f32.gmra.mxu0 %v422
        %v681 = vpop.f32.mrf.mxu0
        %v682 = vadd.f32 %v394, %v681
        %683 = vmatmul.f32.gmra.mxu0 %v425
        %v684 = vpop.f32.mrf.mxu0
        %v685 = vadd.f32 %v394, %v684
        %686 = vmatmul.f32.gmra.mxu0 %v428
        %v687 = vpop.f32.mrf.mxu0
        %v688 = vadd.f32 %v394, %v687
        %689 = vmatmul.f32.gmra.mxu0 %v431
        %v690 = vpop.f32.mrf.mxu0
        %v691 = vadd.f32 %v394, %v690
        %692 = vmatmul.f32.gmra.mxu0 %v434
        %v693 = vpop.f32.mrf.mxu0
        %v694 = vadd.f32 %v394, %v693
        %695 = vmatmul.f32.gmra.mxu0 %v437
        %v696 = vpop.f32.mrf.mxu0
        %v697 = vadd.f32 %v394, %v696
        %698 = vmatmul.f32.gmra.mxu0 %v440
        %v699 = vpop.f32.mrf.mxu0
        %v700 = vadd.f32 %v394, %v699
        %701 = vmatmul.f32.gmra.mxu0 %v443
        %v702 = vpop.f32.mrf.mxu0
        %v703 = vadd.f32 %v394, %v702
        %704 = vmatmul.f32.gmra.mxu0 %v446
        %v705 = vpop.f32.mrf.mxu0
        %v706 = vadd.f32 %v394, %v705
        %707 = vdwg.mxu0
        %v708 = vmax.f32 %v466, 0.0
        %v709 = vmax.f32 %v531, 0.0
        %v710 = vmax.f32 %v596, 0.0
        %v711 = vmax.f32 %v661, 0.0
        %v712 = vmax.f32 %v469, 0.0
        %v713 = vmax.f32 %v534, 0.0
        %v714 = vmax.f32 %v599, 0.0
        %v715 = vmax.f32 %v664, 0.0
        %v716 = vmax.f32 %v472, 0.0
        %v717 = vmax.f32 %v537, 0.0
        %v718 = vmax.f32 %v602, 0.0
        %v719 = vmax.f32 %v667, 0.0
        %v720 = vmax.f32 %v475, 0.0
        %v721 = vmax.f32 %v540, 0.0
        %v722 = vmax.f32 %v605, 0.0
        %v723 = vmax.f32 %v670, 0.0
        %v724 = vmax.f32 %v478, 0.0
        %v725 = vmax.f32 %v543, 0.0
        %v726 = vmax.f32 %v608, 0.0
        %v727 = vmax.f32 %v673, 0.0
        %v728 = vmax.f32 %v481, 0.0
        %v729 = vmax.f32 %v546, 0.0
        %v730 = vmax.f32 %v611, 0.0
        %v731 = vmax.f32 %v676, 0.0
        %v732 = vmax.f32 %v484, 0.0
        %v733 = vmax.f32 %v549, 0.0
        %v734 = vmax.f32 %v614, 0.0
        %v735 = vmax.f32 %v679, 0.0
        %v736 = vmax.f32 %v487, 0.0
        %v737 = vmax.f32 %v552, 0.0
        %v738 = vmax.f32 %v617, 0.0
        %v739 = vmax.f32 %v682, 0.0
        %v740 = vmax.f32 %v490, 0.0
        %v741 = vmax.f32 %v555, 0.0
        %v742 = vmax.f32 %v620, 0.0
        %v743 = vmax.f32 %v685, 0.0
        %v744 = vmax.f32 %v493, 0.0
        %v745 = vmax.f32 %v558, 0.0
        %v746 = vmax.f32 %v623, 0.0
        %v747 = vmax.f32 %v688, 0.0
        %v748 = vmax.f32 %v496, 0.0
        %v749 = vmax.f32 %v561, 0.0
        %v750 = vmax.f32 %v626, 0.0
        %v751 = vmax.f32 %v691, 0.0
        %v752 = vmax.f32 %v499, 0.0
        %v753 = vmax.f32 %v564, 0.0
        %v754 = vmax.f32 %v629, 0.0
        %v755 = vmax.f32 %v694, 0.0
        %v756 = vmax.f32 %v502, 0.0
        %v757 = vmax.f32 %v567, 0.0
        %v758 = vmax.f32 %v632, 0.0
        %v759 = vmax.f32 %v697, 0.0
        %v760 = vmax.f32 %v505, 0.0
        %v761 = vmax.f32 %v570, 0.0
        %v762 = vmax.f32 %v635, 0.0
        %v763 = vmax.f32 %v700, 0.0
        %v764 = vmax.f32 %v508, 0.0
        %v765 = vmax.f32 %v573, 0.0
        %v766 = vmax.f32 %v638, 0.0
        %v767 = vmax.f32 %v703, 0.0
        %v768 = vmax.f32 %v511, 0.0
        %v769 = vmax.f32 %v576, 0.0
        %v770 = vmax.f32 %v641, 0.0
        %v771 = vmax.f32 %v706, 0.0
        %v772 = vld [vmem:[#allocation2] sm:$0xff]
        %v773 = vld [vmem:[#allocation2 + $0x8] sm:$0xff]
        %v774 = vld [vmem:[#allocation2 + $0x10] sm:$0xff]
        %v775 = vld [vmem:[#allocation2 + $0x18] sm:$0xff]
        %v776 = vld [vmem:[#allocation2 + $0x20] sm:$0xff]
        %v777 = vld [vmem:[#allocation2 + $0x28] sm:$0xff]
        %v778 = vld [vmem:[#allocation2 + $0x30] sm:$0xff]
        %v779 = vld [vmem:[#allocation2 + $0x38] sm:$0xff]
        %v780 = vld [vmem:[#allocation2 + $0x40] sm:$0xff]
        %v781 = vld [vmem:[#allocation2 + $0x48] sm:$0xff]
        %v782 = vld [vmem:[#allocation2 + $0x50] sm:$0xff]
        %v783 = vld [vmem:[#allocation2 + $0x58] sm:$0xff]
        %v784 = vld [vmem:[#allocation2 + $0x60] sm:$0xff]
        %v785 = vld [vmem:[#allocation2 + $0x68] sm:$0xff]
        %v786 = vld [vmem:[#allocation2 + $0x70] sm:$0xff]
        %v787 = vld [vmem:[#allocation2 + $0x78] sm:$0xff]
        %v788 = vld [vmem:[#allocation2 + $0x80] sm:$0xff]
        %v789 = vld [vmem:[#allocation2 + $0x88] sm:$0xff]
        %v790 = vld [vmem:[#allocation2 + $0x90] sm:$0xff]
        %v791 = vld [vmem:[#allocation2 + $0x98] sm:$0xff]
        %v792 = vld [vmem:[#allocation2 + $0xa0] sm:$0xff]
        %v793 = vld [vmem:[#allocation2 + $0xa8] sm:$0xff]
        %v794 = vld [vmem:[#allocation2 + $0xb0] sm:$0xff]
        %v795 = vld [vmem:[#allocation2 + $0xb8] sm:$0xff]
        %v796 = vld [vmem:[#allocation2 + $0xc0] sm:$0xff]
        %v797 = vld [vmem:[#allocation2 + $0xc8] sm:$0xff]
        %v798 = vld [vmem:[#allocation2 + $0xd0] sm:$0xff]
        %v799 = vld [vmem:[#allocation2 + $0xd8] sm:$0xff]
        %v800 = vld [vmem:[#allocation2 + $0xe0] sm:$0xff]
        %v801 = vld [vmem:[#allocation2 + $0xe8] sm:$0xff]
        %v802 = vld [vmem:[#allocation2 + $0xf0] sm:$0xff]
        %v803 = vld [vmem:[#allocation2 + $0xf8] sm:$0xff]
        %v804 = vld [vmem:[#allocation2 + $0x100] sm:$0xff]
        %v805 = vld [vmem:[#allocation2 + $0x108] sm:$0xff]
        %v806 = vld [vmem:[#allocation2 + $0x110] sm:$0xff]
        %v807 = vld [vmem:[#allocation2 + $0x118] sm:$0xff]
        %v808 = vld [vmem:[#allocation2 + $0x120] sm:$0xff]
        %v809 = vld [vmem:[#allocation2 + $0x128] sm:$0xff]
        %v810 = vld [vmem:[#allocation2 + $0x130] sm:$0xff]
        %v811 = vld [vmem:[#allocation2 + $0x138] sm:$0xff]
        %v812 = vld [vmem:[#allocation2 + $0x140] sm:$0xff]
        %v813 = vld [vmem:[#allocation2 + $0x148] sm:$0xff]
        %v814 = vld [vmem:[#allocation2 + $0x150] sm:$0xff]
        %v815 = vld [vmem:[#allocation2 + $0x158] sm:$0xff]
        %v816 = vld [vmem:[#allocation2 + $0x160] sm:$0xff]
        %v817 = vld [vmem:[#allocation2 + $0x168] sm:$0xff]
        %v818 = vld [vmem:[#allocation2 + $0x170] sm:$0xff]
        %v819 = vld [vmem:[#allocation2 + $0x178] sm:$0xff]
        %v820 = vld [vmem:[#allocation2 + $0x180] sm:$0xff]
        %v821 = vld [vmem:[#allocation2 + $0x188] sm:$0xff]
        %v822 = vld [vmem:[#allocation2 + $0x190] sm:$0xff]
        %v823 = vld [vmem:[#allocation2 + $0x198] sm:$0xff]
        %v824 = vld [vmem:[#allocation2 + $0x1a0] sm:$0xff]
        %v825 = vld [vmem:[#allocation2 + $0x1a8] sm:$0xff]
        %v826 = vld [vmem:[#allocation2 + $0x1b0] sm:$0xff]
        %v827 = vld [vmem:[#allocation2 + $0x1b8] sm:$0xff]
        %v828 = vld [vmem:[#allocation2 + $0x1c0] sm:$0xff]
        %v829 = vld [vmem:[#allocation2 + $0x1c8] sm:$0xff]
        %v830 = vld [vmem:[#allocation2 + $0x1d0] sm:$0xff]
        %v831 = vld [vmem:[#allocation2 + $0x1d8] sm:$0xff]
        %v832 = vld [vmem:[#allocation2 + $0x1e0] sm:$0xff]
        %v833 = vld [vmem:[#allocation2 + $0x1e8] sm:$0xff]
        %v834 = vld [vmem:[#allocation2 + $0x1f0] sm:$0xff]
        %v835 = vld [vmem:[#allocation2 + $0x1f8] sm:$0xff]
        %v836 = vld [vmem:[#allocation2 + $0x200] sm:$0xff]
        %v837 = vld [vmem:[#allocation2 + $0x208] sm:$0xff]
        %v838 = vld [vmem:[#allocation2 + $0x210] sm:$0xff]
        %v839 = vld [vmem:[#allocation2 + $0x218] sm:$0xff]
        %v840 = vld [vmem:[#allocation2 + $0x220] sm:$0xff]
        %v841 = vld [vmem:[#allocation2 + $0x228] sm:$0xff]
        %v842 = vld [vmem:[#allocation2 + $0x230] sm:$0xff]
        %v843 = vld [vmem:[#allocation2 + $0x238] sm:$0xff]
        %v844 = vld [vmem:[#allocation2 + $0x240] sm:$0xff]
        %v845 = vld [vmem:[#allocation2 + $0x248] sm:$0xff]
        %v846 = vld [vmem:[#allocation2 + $0x250] sm:$0xff]
        %v847 = vld [vmem:[#allocation2 + $0x258] sm:$0xff]
        %v848 = vld [vmem:[#allocation2 + $0x260] sm:$0xff]
        %v849 = vld [vmem:[#allocation2 + $0x268] sm:$0xff]
        %v850 = vld [vmem:[#allocation2 + $0x270] sm:$0xff]
        %v851 = vld [vmem:[#allocation2 + $0x278] sm:$0xff]
        %v852 = vld [vmem:[#allocation2 + $0x280] sm:$0xff]
        %v853 = vld [vmem:[#allocation2 + $0x288] sm:$0xff]
        %v854 = vld [vmem:[#allocation2 + $0x290] sm:$0xff]
        %v855 = vld [vmem:[#allocation2 + $0x298] sm:$0xff]
        %v856 = vld [vmem:[#allocation2 + $0x2a0] sm:$0xff]
        %v857 = vld [vmem:[#allocation2 + $0x2a8] sm:$0xff]
        %v858 = vld [vmem:[#allocation2 + $0x2b0] sm:$0xff]
        %v859 = vld [vmem:[#allocation2 + $0x2b8] sm:$0xff]
        %v860 = vld [vmem:[#allocation2 + $0x2c0] sm:$0xff]
        %v861 = vld [vmem:[#allocation2 + $0x2c8] sm:$0xff]
        %v862 = vld [vmem:[#allocation2 + $0x2d0] sm:$0xff]
        %v863 = vld [vmem:[#allocation2 + $0x2d8] sm:$0xff]
        %v864 = vld [vmem:[#allocation2 + $0x2e0] sm:$0xff]
        %v865 = vld [vmem:[#allocation2 + $0x2e8] sm:$0xff]
        %v866 = vld [vmem:[#allocation2 + $0x2f0] sm:$0xff]
        %v867 = vld [vmem:[#allocation2 + $0x2f8] sm:$0xff]
        %v868 = vld [vmem:[#allocation2 + $0x300] sm:$0xff]
        %v869 = vld [vmem:[#allocation2 + $0x308] sm:$0xff]
        %v870 = vld [vmem:[#allocation2 + $0x310] sm:$0xff]
        %v871 = vld [vmem:[#allocation2 + $0x318] sm:$0xff]
        %v872 = vld [vmem:[#allocation2 + $0x320] sm:$0xff]
        %v873 = vld [vmem:[#allocation2 + $0x328] sm:$0xff]
        %v874 = vld [vmem:[#allocation2 + $0x330] sm:$0xff]
        %v875 = vld [vmem:[#allocation2 + $0x338] sm:$0xff]
        %v876 = vld [vmem:[#allocation2 + $0x340] sm:$0xff]
        %v877 = vld [vmem:[#allocation2 + $0x348] sm:$0xff]
        %v878 = vld [vmem:[#allocation2 + $0x350] sm:$0xff]
        %v879 = vld [vmem:[#allocation2 + $0x358] sm:$0xff]
        %v880 = vld [vmem:[#allocation2 + $0x360] sm:$0xff]
        %v881 = vld [vmem:[#allocation2 + $0x368] sm:$0xff]
        %v882 = vld [vmem:[#allocation2 + $0x370] sm:$0xff]
        %v883 = vld [vmem:[#allocation2 + $0x378] sm:$0xff]
        %v884 = vld [vmem:[#allocation2 + $0x380] sm:$0xff]
        %v885 = vld [vmem:[#allocation2 + $0x388] sm:$0xff]
        %v886 = vld [vmem:[#allocation2 + $0x390] sm:$0xff]
        %v887 = vld [vmem:[#allocation2 + $0x398] sm:$0xff]
        %v888 = vld [vmem:[#allocation2 + $0x3a0] sm:$0xff]
        %v889 = vld [vmem:[#allocation2 + $0x3a8] sm:$0xff]
        %v890 = vld [vmem:[#allocation2 + $0x3b0] sm:$0xff]
        %v891 = vld [vmem:[#allocation2 + $0x3b8] sm:$0xff]
        %v892 = vld [vmem:[#allocation2 + $0x3c0] sm:$0xff]
        %v893 = vld [vmem:[#allocation2 + $0x3c8] sm:$0xff]
        %v894 = vld [vmem:[#allocation2 + $0x3d0] sm:$0xff]
        %v895 = vld [vmem:[#allocation2 + $0x3d8] sm:$0xff]
        %v896 = vld [vmem:[#allocation2 + $0x3e0] sm:$0xff]
        %v897 = vld [vmem:[#allocation2 + $0x3e8] sm:$0xff]
        %v898 = vld [vmem:[#allocation2 + $0x3f0] sm:$0xff]
        %v899 = vld [vmem:[#allocation2 + $0x3f8] sm:$0xff]
        %v900 = vld [vmem:[%s4] sm:$0x3]
        %v902 = vperm.slane %v900, 0
        %v903 = vperm.slane %v900, 1
        %906 = vmatpush.msra.mxu0 %v802
        %907 = vmatpush.msra.mxu0 %v800
        %908 = vmatpush.msra.mxu0 %v798
        %909 = vmatpush.msra.mxu0 %v796
        %910 = vmatpush.msra.mxu0 %v794
        %911 = vmatpush.msra.mxu0 %v792
        %912 = vmatpush.msra.mxu0 %v790
        %913 = vmatpush.msra.mxu0 %v788
        %914 = vmatpush.msra.mxu0 %v786
        %915 = vmatpush.msra.mxu0 %v784
        %916 = vmatpush.msra.mxu0 %v782
        %917 = vmatpush.msra.mxu0 %v780
        %918 = vmatpush.msra.mxu0 %v778
        %919 = vmatpush.msra.mxu0 %v776
        %920 = vmatpush.msra.mxu0 %v774
        %921 = vmatpush.msra.mxu0 %v772
        %922 = vmatmul.f32.gmra.mxu0 %v708
        %v923 = vpop.f32.mrf.mxu0
        %v924 = vadd.f32 %v902, %v923
        %925 = vmatmul.f32.gmra.mxu0 %v712
        %v926 = vpop.f32.mrf.mxu0
        %v927 = vadd.f32 %v902, %v926
        %928 = vmatmul.f32.gmra.mxu0 %v716
        %v929 = vpop.f32.mrf.mxu0
        %v930 = vadd.f32 %v902, %v929
        %931 = vmatmul.f32.gmra.mxu0 %v720
        %v932 = vpop.f32.mrf.mxu0
        %v933 = vadd.f32 %v902, %v932
        %934 = vmatmul.f32.gmra.mxu0 %v724
        %v935 = vpop.f32.mrf.mxu0
        %v936 = vadd.f32 %v902, %v935
        %937 = vmatmul.f32.gmra.mxu0 %v728
        %v938 = vpop.f32.mrf.mxu0
        %v939 = vadd.f32 %v902, %v938
        %940 = vmatmul.f32.gmra.mxu0 %v732
        %v941 = vpop.f32.mrf.mxu0
        %v942 = vadd.f32 %v902, %v941
        %943 = vmatmul.f32.gmra.mxu0 %v736
        %v944 = vpop.f32.mrf.mxu0
        %v945 = vadd.f32 %v902, %v944
        %946 = vmatmul.f32.gmra.mxu0 %v740
        %v947 = vpop.f32.mrf.mxu0
        %v948 = vadd.f32 %v902, %v947
        %949 = vmatmul.f32.gmra.mxu0 %v744
        %v950 = vpop.f32.mrf.mxu0
        %v951 = vadd.f32 %v902, %v950
        %952 = vmatmul.f32.gmra.mxu0 %v748
        %v953 = vpop.f32.mrf.mxu0
        %v954 = vadd.f32 %v902, %v953
        %955 = vmatmul.f32.gmra.mxu0 %v752
        %v956 = vpop.f32.mrf.mxu0
        %v957 = vadd.f32 %v902, %v956
        %958 = vmatmul.f32.gmra.mxu0 %v756
        %v959 = vpop.f32.mrf.mxu0
        %v960 = vadd.f32 %v902, %v959
        %961 = vmatmul.f32.gmra.mxu0 %v760
        %v962 = vpop.f32.mrf.mxu0
        %v963 = vadd.f32 %v902, %v962
        %964 = vmatmul.f32.gmra.mxu0 %v764
        %v965 = vpop.f32.mrf.mxu0
        %v966 = vadd.f32 %v902, %v965
        %967 = vmatmul.f32.gmra.mxu0 %v768
        %v968 = vpop.f32.mrf.mxu0
        %v969 = vadd.f32 %v902, %v968
        %970 = vdwg.mxu0
        %971 = vmatpush.msra.mxu0 %v834
        %972 = vmatpush.msra.mxu0 %v832
        %973 = vmatpush.msra.mxu0 %v830
        %974 = vmatpush.msra.mxu0 %v828
        %975 = vmatpush.msra.mxu0 %v826
        %976 = vmatpush.msra.mxu0 %v824
        %977 = vmatpush.msra.mxu0 %v822
        %978 = vmatpush.msra.mxu0 %v820
        %979 = vmatpush.msra.mxu0 %v818
        %980 = vmatpush.msra.mxu0 %v816
        %981 = vmatpush.msra.mxu0 %v814
        %982 = vmatpush.msra.mxu0 %v812
        %983 = vmatpush.msra.mxu0 %v810
        %984 = vmatpush.msra.mxu0 %v808
        %985 = vmatpush.msra.mxu0 %v806
        %986 = vmatpush.msra.mxu0 %v804
        %987 = vmatmul.f32.gmra.mxu0 %v709
        %v988 = vpop.f32.mrf.mxu0
        %v989 = vadd.f32 %v924, %v988
        %990 = vmatmul.f32.gmra.mxu0 %v713
        %v991 = vpop.f32.mrf.mxu0
        %v992 = vadd.f32 %v927, %v991
        %993 = vmatmul.f32.gmra.mxu0 %v717
        %v994 = vpop.f32.mrf.mxu0
        %v995 = vadd.f32 %v930, %v994
        %996 = vmatmul.f32.gmra.mxu0 %v721
        %v997 = vpop.f32.mrf.mxu0
        %v998 = vadd.f32 %v933, %v997
        %999 = vmatmul.f32.gmra.mxu0 %v725
        %v1000 = vpop.f32.mrf.mxu0
        %v1001 = vadd.f32 %v936, %v1000
        %1002 = vmatmul.f32.gmra.mxu0 %v729
        %v1003 = vpop.f32.mrf.mxu0
        %v1004 = vadd.f32 %v939, %v1003
        %1005 = vmatmul.f32.gmra.mxu0 %v733
        %v1006 = vpop.f32.mrf.mxu0
        %v1007 = vadd.f32 %v942, %v1006
        %1008 = vmatmul.f32.gmra.mxu0 %v737
        %v1009 = vpop.f32.mrf.mxu0
        %v1010 = vadd.f32 %v945, %v1009
        %1011 = vmatmul.f32.gmra.mxu0 %v741
        %v1012 = vpop.f32.mrf.mxu0
        %v1013 = vadd.f32 %v948, %v1012
        %1014 = vmatmul.f32.gmra.mxu0 %v745
        %v1015 = vpop.f32.mrf.mxu0
        %v1016 = vadd.f32 %v951, %v1015
        %1017 = vmatmul.f32.gmra.mxu0 %v749
        %v1018 = vpop.f32.mrf.mxu0
        %v1019 = vadd.f32 %v954, %v1018
        %1020 = vmatmul.f32.gmra.mxu0 %v753
        %v1021 = vpop.f32.mrf.mxu0
        %v1022 = vadd.f32 %v957, %v1021
        %1023 = vmatmul.f32.gmra.mxu0 %v757
        %v1024 = vpop.f32.mrf.mxu0
        %v1025 = vadd.f32 %v960, %v1024
        %1026 = vmatmul.f32.gmra.mxu0 %v761
        %v1027 = vpop.f32.mrf.mxu0
        %v1028 = vadd.f32 %v963, %v1027
        %1029 = vmatmul.f32.gmra.mxu0 %v765
        %v1030 = vpop.f32.mrf.mxu0
        %v1031 = vadd.f32 %v966, %v1030
        %1032 = vmatmul.f32.gmra.mxu0 %v769
        %v1033 = vpop.f32.mrf.mxu0
        %v1034 = vadd.f32 %v969, %v1033
        %1035 = vdwg.mxu0
        %1036 = vmatpush.msra.mxu0 %v866
        %1037 = vmatpush.msra.mxu0 %v864
        %1038 = vmatpush.msra.mxu0 %v862
        %1039 = vmatpush.msra.mxu0 %v860
        %1040 = vmatpush.msra.mxu0 %v858
        %1041 = vmatpush.msra.mxu0 %v856
        %1042 = vmatpush.msra.mxu0 %v854
        %1043 = vmatpush.msra.mxu0 %v852
        %1044 = vmatpush.msra.mxu0 %v850
        %1045 = vmatpush.msra.mxu0 %v848
        %1046 = vmatpush.msra.mxu0 %v846
        %1047 = vmatpush.msra.mxu0 %v844
        %1048 = vmatpush.msra.mxu0 %v842
        %1049 = vmatpush.msra.mxu0 %v840
        %1050 = vmatpush.msra.mxu0 %v838
        %1051 = vmatpush.msra.mxu0 %v836
        %1052 = vmatmul.f32.gmra.mxu0 %v710
        %v1053 = vpop.f32.mrf.mxu0
        %v1054 = vadd.f32 %v989, %v1053
        %1055 = vmatmul.f32.gmra.mxu0 %v714
        %v1056 = vpop.f32.mrf.mxu0
        %v1057 = vadd.f32 %v992, %v1056
        %1058 = vmatmul.f32.gmra.mxu0 %v718
        %v1059 = vpop.f32.mrf.mxu0
        %v1060 = vadd.f32 %v995, %v1059
        %1061 = vmatmul.f32.gmra.mxu0 %v722
        %v1062 = vpop.f32.mrf.mxu0
        %v1063 = vadd.f32 %v998, %v1062
        %1064 = vmatmul.f32.gmra.mxu0 %v726
        %v1065 = vpop.f32.mrf.mxu0
        %v1066 = vadd.f32 %v1001, %v1065
        %1067 = vmatmul.f32.gmra.mxu0 %v730
        %v1068 = vpop.f32.mrf.mxu0
        %v1069 = vadd.f32 %v1004, %v1068
        %1070 = vmatmul.f32.gmra.mxu0 %v734
        %v1071 = vpop.f32.mrf.mxu0
        %v1072 = vadd.f32 %v1007, %v1071
        %1073 = vmatmul.f32.gmra.mxu0 %v738
        %v1074 = vpop.f32.mrf.mxu0
        %v1075 = vadd.f32 %v1010, %v1074
        %1076 = vmatmul.f32.gmra.mxu0 %v742
        %v1077 = vpop.f32.mrf.mxu0
        %v1078 = vadd.f32 %v1013, %v1077
        %1079 = vmatmul.f32.gmra.mxu0 %v746
        %v1080 = vpop.f32.mrf.mxu0
        %v1081 = vadd.f32 %v1016, %v1080
        %1082 = vmatmul.f32.gmra.mxu0 %v750
        %v1083 = vpop.f32.mrf.mxu0
        %v1084 = vadd.f32 %v1019, %v1083
        %1085 = vmatmul.f32.gmra.mxu0 %v754
        %v1086 = vpop.f32.mrf.mxu0
        %v1087 = vadd.f32 %v1022, %v1086
        %1088 = vmatmul.f32.gmra.mxu0 %v758
        %v1089 = vpop.f32.mrf.mxu0
        %v1090 = vadd.f32 %v1025, %v1089
        %1091 = vmatmul.f32.gmra.mxu0 %v762
        %v1092 = vpop.f32.mrf.mxu0
        %v1093 = vadd.f32 %v1028, %v1092
        %1094 = vmatmul.f32.gmra.mxu0 %v766
        %v1095 = vpop.f32.mrf.mxu0
        %v1096 = vadd.f32 %v1031, %v1095
        %1097 = vmatmul.f32.gmra.mxu0 %v770
        %v1098 = vpop.f32.mrf.mxu0
        %v1099 = vadd.f32 %v1034, %v1098
        %1100 = vdwg.mxu0
        %1101 = vmatpush.msra.mxu0 %v898
        %1102 = vmatpush.msra.mxu0 %v896
        %1103 = vmatpush.msra.mxu0 %v894
        %1104 = vmatpush.msra.mxu0 %v892
        %1105 = vmatpush.msra.mxu0 %v890
        %1106 = vmatpush.msra.mxu0 %v888
        %1107 = vmatpush.msra.mxu0 %v886
        %1108 = vmatpush.msra.mxu0 %v884
        %1109 = vmatpush.msra.mxu0 %v882
        %1110 = vmatpush.msra.mxu0 %v880
        %1111 = vmatpush.msra.mxu0 %v878
        %1112 = vmatpush.msra.mxu0 %v876
        %1113 = vmatpush.msra.mxu0 %v874
        %1114 = vmatpush.msra.mxu0 %v872
        %1115 = vmatpush.msra.mxu0 %v870
        %1116 = vmatpush.msra.mxu0 %v868
        %1117 = vmatmul.f32.gmra.mxu0 %v711
        %v1118 = vpop.f32.mrf.mxu0
        %v1119 = vadd.f32 %v1054, %v1118
        %1120 = vmatmul.f32.gmra.mxu0 %v715
        %v1121 = vpop.f32.mrf.mxu0
        %v1122 = vadd.f32 %v1057, %v1121
        %1123 = vmatmul.f32.gmra.mxu0 %v719
        %v1124 = vpop.f32.mrf.mxu0
        %v1125 = vadd.f32 %v1060, %v1124
        %1126 = vmatmul.f32.gmra.mxu0 %v723
        %v1127 = vpop.f32.mrf.mxu0
        %v1128 = vadd.f32 %v1063, %v1127
        %1129 = vmatmul.f32.gmra.mxu0 %v727
        %v1130 = vpop.f32.mrf.mxu0
        %v1131 = vadd.f32 %v1066, %v1130
        %1132 = vmatmul.f32.gmra.mxu0 %v731
        %v1133 = vpop.f32.mrf.mxu0
        %v1134 = vadd.f32 %v1069, %v1133
        %1135 = vmatmul.f32.gmra.mxu0 %v735
        %v1136 = vpop.f32.mrf.mxu0
        %v1137 = vadd.f32 %v1072, %v1136
        %1138 = vmatmul.f32.gmra.mxu0 %v739
        %v1139 = vpop.f32.mrf.mxu0
        %v1140 = vadd.f32 %v1075, %v1139
        %1141 = vmatmul.f32.gmra.mxu0 %v743
        %v1142 = vpop.f32.mrf.mxu0
        %v1143 = vadd.f32 %v1078, %v1142
        %1144 = vmatmul.f32.gmra.mxu0 %v747
        %v1145 = vpop.f32.mrf.mxu0
        %v1146 = vadd.f32 %v1081, %v1145
        %1147 = vmatmul.f32.gmra.mxu0 %v751
        %v1148 = vpop.f32.mrf.mxu0
        %v1149 = vadd.f32 %v1084, %v1148
        %1150 = vmatmul.f32.gmra.mxu0 %v755
        %v1151 = vpop.f32.mrf.mxu0
        %v1152 = vadd.f32 %v1087, %v1151
        %1153 = vmatmul.f32.gmra.mxu0 %v759
        %v1154 = vpop.f32.mrf.mxu0
        %v1155 = vadd.f32 %v1090, %v1154
        %1156 = vmatmul.f32.gmra.mxu0 %v763
        %v1157 = vpop.f32.mrf.mxu0
        %v1158 = vadd.f32 %v1093, %v1157
        %1159 = vmatmul.f32.gmra.mxu0 %v767
        %v1160 = vpop.f32.mrf.mxu0
        %v1161 = vadd.f32 %v1096, %v1160
        %1162 = vmatmul.f32.gmra.mxu0 %v771
        %v1163 = vpop.f32.mrf.mxu0
        %v1164 = vadd.f32 %v1099, %v1163
        %1165 = vdwg.mxu0
        %1166 = vmatpush.msra.mxu0 %v803
        %1167 = vmatpush.msra.mxu0 %v801
        %1168 = vmatpush.msra.mxu0 %v799
        %1169 = vmatpush.msra.mxu0 %v797
        %1170 = vmatpush.msra.mxu0 %v795
        %1171 = vmatpush.msra.mxu0 %v793
        %1172 = vmatpush.msra.mxu0 %v791
        %1173 = vmatpush.msra.mxu0 %v789
        %1174 = vmatpush.msra.mxu0 %v787
        %1175 = vmatpush.msra.mxu0 %v785
        %1176 = vmatpush.msra.mxu0 %v783
        %1177 = vmatpush.msra.mxu0 %v781
        %1178 = vmatpush.msra.mxu0 %v779
        %1179 = vmatpush.msra.mxu0 %v777
        %1180 = vmatpush.msra.mxu0 %v775
        %1181 = vmatpush.msra.mxu0 %v773
        %1182 = vmatmul.f32.gmra.mxu0 %v708
        %v1183 = vpop.f32.mrf.mxu0
        %v1184 = vadd.f32 %v903, %v1183
        %1185 = vmatmul.f32.gmra.mxu0 %v712
        %v1186 = vpop.f32.mrf.mxu0
        %v1187 = vadd.f32 %v903, %v1186
        %1188 = vmatmul.f32.gmra.mxu0 %v716
        %v1189 = vpop.f32.mrf.mxu0
        %v1190 = vadd.f32 %v903, %v1189
        %1191 = vmatmul.f32.gmra.mxu0 %v720
        %v1192 = vpop.f32.mrf.mxu0
        %v1193 = vadd.f32 %v903, %v1192
        %1194 = vmatmul.f32.gmra.mxu0 %v724
        %v1195 = vpop.f32.mrf.mxu0
        %v1196 = vadd.f32 %v903, %v1195
        %1197 = vmatmul.f32.gmra.mxu0 %v728
        %v1198 = vpop.f32.mrf.mxu0
        %v1199 = vadd.f32 %v903, %v1198
        %1200 = vmatmul.f32.gmra.mxu0 %v732
        %v1201 = vpop.f32.mrf.mxu0
        %v1202 = vadd.f32 %v903, %v1201
        %1203 = vmatmul.f32.gmra.mxu0 %v736
        %v1204 = vpop.f32.mrf.mxu0
        %v1205 = vadd.f32 %v903, %v1204
        %1206 = vmatmul.f32.gmra.mxu0 %v740
        %v1207 = vpop.f32.mrf.mxu0
        %v1208 = vadd.f32 %v903, %v1207
        %1209 = vmatmul.f32.gmra.mxu0 %v744
        %v1210 = vpop.f32.mrf.mxu0
        %v1211 = vadd.f32 %v903, %v1210
        %1212 = vmatmul.f32.gmra.mxu0 %v748
        %v1213 = vpop.f32.mrf.mxu0
        %v1214 = vadd.f32 %v903, %v1213
        %1215 = vmatmul.f32.gmra.mxu0 %v752
        %v1216 = vpop.f32.mrf.mxu0
        %v1217 = vadd.f32 %v903, %v1216
        %1218 = vmatmul.f32.gmra.mxu0 %v756
        %v1219 = vpop.f32.mrf.mxu0
        %v1220 = vadd.f32 %v903, %v1219
        %1221 = vmatmul.f32.gmra.mxu0 %v760
        %v1222 = vpop.f32.mrf.mxu0
        %v1223 = vadd.f32 %v903, %v1222
        %1224 = vmatmul.f32.gmra.mxu0 %v764
        %v1225 = vpop.f32.mrf.mxu0
        %v1226 = vadd.f32 %v903, %v1225
        %1227 = vmatmul.f32.gmra.mxu0 %v768
        %v1228 = vpop.f32.mrf.mxu0
        %v1229 = vadd.f32 %v903, %v1228
        %1230 = vdwg.mxu0
        %1231 = vmatpush.msra.mxu0 %v835
        %1232 = vmatpush.msra.mxu0 %v833
        %1233 = vmatpush.msra.mxu0 %v831
        %1234 = vmatpush.msra.mxu0 %v829
        %1235 = vmatpush.msra.mxu0 %v827
        %1236 = vmatpush.msra.mxu0 %v825
        %1237 = vmatpush.msra.mxu0 %v823
        %1238 = vmatpush.msra.mxu0 %v821
        %1239 = vmatpush.msra.mxu0 %v819
        %1240 = vmatpush.msra.mxu0 %v817
        %1241 = vmatpush.msra.mxu0 %v815
        %1242 = vmatpush.msra.mxu0 %v813
        %1243 = vmatpush.msra.mxu0 %v811
        %1244 = vmatpush.msra.mxu0 %v809
        %1245 = vmatpush.msra.mxu0 %v807
        %1246 = vmatpush.msra.mxu0 %v805
        %1247 = vmatmul.f32.gmra.mxu0 %v709
        %v1248 = vpop.f32.mrf.mxu0
        %v1249 = vadd.f32 %v1184, %v1248
        %1250 = vmatmul.f32.gmra.mxu0 %v713
        %v1251 = vpop.f32.mrf.mxu0
        %v1252 = vadd.f32 %v1187, %v1251
        %1253 = vmatmul.f32.gmra.mxu0 %v717
        %v1254 = vpop.f32.mrf.mxu0
        %v1255 = vadd.f32 %v1190, %v1254
        %1256 = vmatmul.f32.gmra.mxu0 %v721
        %v1257 = vpop.f32.mrf.mxu0
        %v1258 = vadd.f32 %v1193, %v1257
        %1259 = vmatmul.f32.gmra.mxu0 %v725
        %v1260 = vpop.f32.mrf.mxu0
        %v1261 = vadd.f32 %v1196, %v1260
        %1262 = vmatmul.f32.gmra.mxu0 %v729
        %v1263 = vpop.f32.mrf.mxu0
        %v1264 = vadd.f32 %v1199, %v1263
        %1265 = vmatmul.f32.gmra.mxu0 %v733
        %v1266 = vpop.f32.mrf.mxu0
        %v1267 = vadd.f32 %v1202, %v1266
        %1268 = vmatmul.f32.gmra.mxu0 %v737
        %v1269 = vpop.f32.mrf.mxu0
        %v1270 = vadd.f32 %v1205, %v1269
        %1271 = vmatmul.f32.gmra.mxu0 %v741
        %v1272 = vpop.f32.mrf.mxu0
        %v1273 = vadd.f32 %v1208, %v1272
        %1274 = vmatmul.f32.gmra.mxu0 %v745
        %v1275 = vpop.f32.mrf.mxu0
        %v1276 = vadd.f32 %v1211, %v1275
        %1277 = vmatmul.f32.gmra.mxu0 %v749
        %v1278 = vpop.f32.mrf.mxu0
        %v1279 = vadd.f32 %v1214, %v1278
        %1280 = vmatmul.f32.gmra.mxu0 %v753
        %v1281 = vpop.f32.mrf.mxu0
        %v1282 = vadd.f32 %v1217, %v1281
        %1283 = vmatmul.f32.gmra.mxu0 %v757
        %v1284 = vpop.f32.mrf.mxu0
        %v1285 = vadd.f32 %v1220, %v1284
        %1286 = vmatmul.f32.gmra.mxu0 %v761
        %v1287 = vpop.f32.mrf.mxu0
        %v1288 = vadd.f32 %v1223, %v1287
        %1289 = vmatmul.f32.gmra.mxu0 %v765
        %v1290 = vpop.f32.mrf.mxu0
        %v1291 = vadd.f32 %v1226, %v1290
        %1292 = vmatmul.f32.gmra.mxu0 %v769
        %v1293 = vpop.f32.mrf.mxu0
        %v1294 = vadd.f32 %v1229, %v1293
        %1295 = vdwg.mxu0
        %1296 = vmatpush.msra.mxu0 %v867
        %1297 = vmatpush.msra.mxu0 %v865
        %1298 = vmatpush.msra.mxu0 %v863
        %1299 = vmatpush.msra.mxu0 %v861
        %1300 = vmatpush.msra.mxu0 %v859
        %1301 = vmatpush.msra.mxu0 %v857
        %1302 = vmatpush.msra.mxu0 %v855
        %1303 = vmatpush.msra.mxu0 %v853
        %1304 = vmatpush.msra.mxu0 %v851
        %1305 = vmatpush.msra.mxu0 %v849
        %1306 = vmatpush.msra.mxu0 %v847
        %1307 = vmatpush.msra.mxu0 %v845
        %1308 = vmatpush.msra.mxu0 %v843
        %1309 = vmatpush.msra.mxu0 %v841
        %1310 = vmatpush.msra.mxu0 %v839
        %1311 = vmatpush.msra.mxu0 %v837
        %1312 = vmatmul.f32.gmra.mxu0 %v710
        %v1313 = vpop.f32.mrf.mxu0
        %v1314 = vadd.f32 %v1249, %v1313
        %1315 = vmatmul.f32.gmra.mxu0 %v714
        %v1316 = vpop.f32.mrf.mxu0
        %v1317 = vadd.f32 %v1252, %v1316
        %1318 = vmatmul.f32.gmra.mxu0 %v718
        %v1319 = vpop.f32.mrf.mxu0
        %v1320 = vadd.f32 %v1255, %v1319
        %1321 = vmatmul.f32.gmra.mxu0 %v722
        %v1322 = vpop.f32.mrf.mxu0
        %v1323 = vadd.f32 %v1258, %v1322
        %1324 = vmatmul.f32.gmra.mxu0 %v726
        %v1325 = vpop.f32.mrf.mxu0
        %v1326 = vadd.f32 %v1261, %v1325
        %1327 = vmatmul.f32.gmra.mxu0 %v730
        %v1328 = vpop.f32.mrf.mxu0
        %v1329 = vadd.f32 %v1264, %v1328
        %1330 = vmatmul.f32.gmra.mxu0 %v734
        %v1331 = vpop.f32.mrf.mxu0
        %v1332 = vadd.f32 %v1267, %v1331
        %1333 = vmatmul.f32.gmra.mxu0 %v738
        %v1334 = vpop.f32.mrf.mxu0
        %v1335 = vadd.f32 %v1270, %v1334
        %1336 = vmatmul.f32.gmra.mxu0 %v742
        %v1337 = vpop.f32.mrf.mxu0
        %v1338 = vadd.f32 %v1273, %v1337
        %1339 = vmatmul.f32.gmra.mxu0 %v746
        %v1340 = vpop.f32.mrf.mxu0
        %v1341 = vadd.f32 %v1276, %v1340
        %1342 = vmatmul.f32.gmra.mxu0 %v750
        %v1343 = vpop.f32.mrf.mxu0
        %v1344 = vadd.f32 %v1279, %v1343
        %1345 = vmatmul.f32.gmra.mxu0 %v754
        %v1346 = vpop.f32.mrf.mxu0
        %v1347 = vadd.f32 %v1282, %v1346
        %1348 = vmatmul.f32.gmra.mxu0 %v758
        %v1349 = vpop.f32.mrf.mxu0
        %v1350 = vadd.f32 %v1285, %v1349
        %1351 = vmatmul.f32.gmra.mxu0 %v762
        %v1352 = vpop.f32.mrf.mxu0
        %v1353 = vadd.f32 %v1288, %v1352
        %1354 = vmatmul.f32.gmra.mxu0 %v766
        %v1355 = vpop.f32.mrf.mxu0
        %v1356 = vadd.f32 %v1291, %v1355
        %1357 = vmatmul.f32.gmra.mxu0 %v770
        %v1358 = vpop.f32.mrf.mxu0
        %v1359 = vadd.f32 %v1294, %v1358
        %1360 = vdwg.mxu0
        %1361 = vmatpush.msra.mxu0 %v899
        %1362 = vmatpush.msra.mxu0 %v897
        %1363 = vmatpush.msra.mxu0 %v895
        %1364 = vmatpush.msra.mxu0 %v893
        %1365 = vmatpush.msra.mxu0 %v891
        %1366 = vmatpush.msra.mxu0 %v889
        %1367 = vmatpush.msra.mxu0 %v887
        %1368 = vmatpush.msra.mxu0 %v885
        %1369 = vmatpush.msra.mxu0 %v883
        %1370 = vmatpush.msra.mxu0 %v881
        %1371 = vmatpush.msra.mxu0 %v879
        %1372 = vmatpush.msra.mxu0 %v877
        %1373 = vmatpush.msra.mxu0 %v875
        %1374 = vmatpush.msra.mxu0 %v873
        %1375 = vmatpush.msra.mxu0 %v871
        %1376 = vmatpush.msra.mxu0 %v869
        %1377 = vmatmul.f32.gmra.mxu0 %v711
        %v1378 = vpop.f32.mrf.mxu0
        %v1379 = vadd.f32 %v1314, %v1378
        %1380 = vmatmul.f32.gmra.mxu0 %v715
        %v1381 = vpop.f32.mrf.mxu0
        %v1382 = vadd.f32 %v1317, %v1381
        %1383 = vmatmul.f32.gmra.mxu0 %v719
        %v1384 = vpop.f32.mrf.mxu0
        %v1385 = vadd.f32 %v1320, %v1384
        %1386 = vmatmul.f32.gmra.mxu0 %v723
        %v1387 = vpop.f32.mrf.mxu0
        %v1388 = vadd.f32 %v1323, %v1387
        %1389 = vmatmul.f32.gmra.mxu0 %v727
        %v1390 = vpop.f32.mrf.mxu0
        %v1391 = vadd.f32 %v1326, %v1390
        %1392 = vmatmul.f32.gmra.mxu0 %v731
        %v1393 = vpop.f32.mrf.mxu0
        %v1394 = vadd.f32 %v1329, %v1393
        %1395 = vmatmul.f32.gmra.mxu0 %v735
        %v1396 = vpop.f32.mrf.mxu0
        %v1397 = vadd.f32 %v1332, %v1396
        %1398 = vmatmul.f32.gmra.mxu0 %v739
        %v1399 = vpop.f32.mrf.mxu0
        %v1400 = vadd.f32 %v1335, %v1399
        %1401 = vmatmul.f32.gmra.mxu0 %v743
        %v1402 = vpop.f32.mrf.mxu0
        %v1403 = vadd.f32 %v1338, %v1402
        %1404 = vmatmul.f32.gmra.mxu0 %v747
        %v1405 = vpop.f32.mrf.mxu0
        %v1406 = vadd.f32 %v1341, %v1405
        %1407 = vmatmul.f32.gmra.mxu0 %v751
        %v1408 = vpop.f32.mrf.mxu0
        %v1409 = vadd.f32 %v1344, %v1408
        %1410 = vmatmul.f32.gmra.mxu0 %v755
        %v1411 = vpop.f32.mrf.mxu0
        %v1412 = vadd.f32 %v1347, %v1411
        %1413 = vmatmul.f32.gmra.mxu0 %v759
        %v1414 = vpop.f32.mrf.mxu0
        %v1415 = vadd.f32 %v1350, %v1414
        %1416 = vmatmul.f32.gmra.mxu0 %v763
        %v1417 = vpop.f32.mrf.mxu0
        %v1418 = vadd.f32 %v1353, %v1417
        %1419 = vmatmul.f32.gmra.mxu0 %v767
        %v1420 = vpop.f32.mrf.mxu0
        %v1421 = vadd.f32 %v1356, %v1420
        %1422 = vmatmul.f32.gmra.mxu0 %v771
        %v1423 = vpop.f32.mrf.mxu0
        %v1424 = vadd.f32 %v1359, %v1423
        %1425 = vdwg.mxu0
        %v1426 = vmax.f32 %v1119, 0.0
        %v1427 = vmax.f32 %v1379, 0.0
        %v1428 = vmax.f32 %v1122, 0.0
        %v1429 = vmax.f32 %v1382, 0.0
        %v1430 = vmax.f32 %v1125, 0.0
        %v1431 = vmax.f32 %v1385, 0.0
        %v1432 = vmax.f32 %v1128, 0.0
        %v1433 = vmax.f32 %v1388, 0.0
        %v1434 = vmax.f32 %v1131, 0.0
        %v1435 = vmax.f32 %v1391, 0.0
        %v1436 = vmax.f32 %v1134, 0.0
        %v1437 = vmax.f32 %v1394, 0.0
        %v1438 = vmax.f32 %v1137, 0.0
        %v1439 = vmax.f32 %v1397, 0.0
        %v1440 = vmax.f32 %v1140, 0.0
        %v1441 = vmax.f32 %v1400, 0.0
        %v1442 = vmax.f32 %v1143, 0.0
        %v1443 = vmax.f32 %v1403, 0.0
        %v1444 = vmax.f32 %v1146, 0.0
        %v1445 = vmax.f32 %v1406, 0.0
        %v1446 = vmax.f32 %v1149, 0.0
        %v1447 = vmax.f32 %v1409, 0.0
        %v1448 = vmax.f32 %v1152, 0.0
        %v1449 = vmax.f32 %v1412, 0.0
        %v1450 = vmax.f32 %v1155, 0.0
        %v1451 = vmax.f32 %v1415, 0.0
        %v1452 = vmax.f32 %v1158, 0.0
        %v1453 = vmax.f32 %v1418, 0.0
        %v1454 = vmax.f32 %v1161, 0.0
        %v1455 = vmax.f32 %v1421, 0.0
        %v1456 = vmax.f32 %v1164, 0.0
        %v1457 = vmax.f32 %v1424, 0.0
        %v1458 = vld [vmem:[%s5] sm:$0xff]
        %v1459 = vld [vmem:[%s5 + $0x8] sm:$0xff]
        %v1460 = vld [vmem:[%s5 + $0x10] sm:$0xff]
        %v1461 = vld [vmem:[%s5 + $0x18] sm:$0xff]
        %v1462 = vld [vmem:[%s5 + $0x20] sm:$0xff]
        %v1463 = vld [vmem:[%s5 + $0x28] sm:$0xff]
        %v1464 = vld [vmem:[%s5 + $0x30] sm:$0xff]
        %v1465 = vld [vmem:[%s5 + $0x38] sm:$0xff]
        %v1466 = vld [vmem:[%s5 + $0x40] sm:$0xff]
        %v1467 = vld [vmem:[%s5 + $0x48] sm:$0xff]
        %v1468 = vld [vmem:[%s5 + $0x50] sm:$0xff]
        %v1469 = vld [vmem:[%s5 + $0x58] sm:$0xff]
        %v1470 = vld [vmem:[%s5 + $0x60] sm:$0xff]
        %v1471 = vld [vmem:[%s5 + $0x68] sm:$0xff]
        %v1472 = vld [vmem:[%s5 + $0x70] sm:$0xff]
        %v1473 = vld [vmem:[%s5 + $0x78] sm:$0xff]
        %v1474 = vld [vmem:[%s5 + $0x80] sm:$0xff]
        %v1475 = vld [vmem:[%s5 + $0x88] sm:$0xff]
        %v1476 = vld [vmem:[%s5 + $0x90] sm:$0xff]
        %v1477 = vld [vmem:[%s5 + $0x98] sm:$0xff]
        %v1478 = vld [vmem:[%s5 + $0xa0] sm:$0xff]
        %v1479 = vld [vmem:[%s5 + $0xa8] sm:$0xff]
        %v1480 = vld [vmem:[%s5 + $0xb0] sm:$0xff]
        %v1481 = vld [vmem:[%s5 + $0xb8] sm:$0xff]
        %v1482 = vld [vmem:[%s5 + $0xc0] sm:$0xff]
        %v1483 = vld [vmem:[%s5 + $0xc8] sm:$0xff]
        %v1484 = vld [vmem:[%s5 + $0xd0] sm:$0xff]
        %v1485 = vld [vmem:[%s5 + $0xd8] sm:$0xff]
        %v1486 = vld [vmem:[%s5 + $0xe0] sm:$0xff]
        %v1487 = vld [vmem:[%s5 + $0xe8] sm:$0xff]
        %v1488 = vld [vmem:[%s5 + $0xf0] sm:$0xff]
        %v1489 = vld [vmem:[%s5 + $0xf8] sm:$0xff]
        %v1490 = vld [vmem:[%s6] sm:$0x1]
        %v1492 = vperm.slane %v1490, 0
        %1494 = vmatpush.msra.mxu0 %v1473
        %1495 = vmatpush.msra.mxu0 %v1472
        %1496 = vmatpush.msra.mxu0 %v1471
        %1497 = vmatpush.msra.mxu0 %v1470
        %1498 = vmatpush.msra.mxu0 %v1469
        %1499 = vmatpush.msra.mxu0 %v1468
        %1500 = vmatpush.msra.mxu0 %v1467
        %1501 = vmatpush.msra.mxu0 %v1466
        %1502 = vmatpush.msra.mxu0 %v1465
        %1503 = vmatpush.msra.mxu0 %v1464
        %1504 = vmatpush.msra.mxu0 %v1463
        %1505 = vmatpush.msra.mxu0 %v1462
        %1506 = vmatpush.msra.mxu0 %v1461
        %1507 = vmatpush.msra.mxu0 %v1460
        %1508 = vmatpush.msra.mxu0 %v1459
        %1509 = vmatpush.msra.mxu0 %v1458
        %1510 = vmatmul.f32.gmra.mxu0 %v1426
        %v1511 = vpop.f32.mrf.mxu0
        %v1512 = vadd.f32 %v1492, %v1511
        %1513 = vmatmul.f32.gmra.mxu0 %v1428
        %v1514 = vpop.f32.mrf.mxu0
        %v1515 = vadd.f32 %v1492, %v1514
        %1516 = vmatmul.f32.gmra.mxu0 %v1430
        %v1517 = vpop.f32.mrf.mxu0
        %v1518 = vadd.f32 %v1492, %v1517
        %1519 = vmatmul.f32.gmra.mxu0 %v1432
        %v1520 = vpop.f32.mrf.mxu0
        %v1521 = vadd.f32 %v1492, %v1520
        %1522 = vmatmul.f32.gmra.mxu0 %v1434
        %v1523 = vpop.f32.mrf.mxu0
        %v1524 = vadd.f32 %v1492, %v1523
        %1525 = vmatmul.f32.gmra.mxu0 %v1436
        %v1526 = vpop.f32.mrf.mxu0
        %v1527 = vadd.f32 %v1492, %v1526
        %1528 = vmatmul.f32.gmra.mxu0 %v1438
        %v1529 = vpop.f32.mrf.mxu0
        %v1530 = vadd.f32 %v1492, %v1529
        %1531 = vmatmul.f32.gmra.mxu0 %v1440
        %v1532 = vpop.f32.mrf.mxu0
        %v1533 = vadd.f32 %v1492, %v1532
        %1534 = vmatmul.f32.gmra.mxu0 %v1442
        %v1535 = vpop.f32.mrf.mxu0
        %v1536 = vadd.f32 %v1492, %v1535
        %1537 = vmatmul.f32.gmra.mxu0 %v1444
        %v1538 = vpop.f32.mrf.mxu0
        %v1539 = vadd.f32 %v1492, %v1538
        %1540 = vmatmul.f32.gmra.mxu0 %v1446
        %v1541 = vpop.f32.mrf.mxu0
        %v1542 = vadd.f32 %v1492, %v1541
        %1543 = vmatmul.f32.gmra.mxu0 %v1448
        %v1544 = vpop.f32.mrf.mxu0
        %v1545 = vadd.f32 %v1492, %v1544
        %1546 = vmatmul.f32.gmra.mxu0 %v1450
        %v1547 = vpop.f32.mrf.mxu0
        %v1548 = vadd.f32 %v1492, %v1547
        %1549 = vmatmul.f32.gmra.mxu0 %v1452
        %v1550 = vpop.f32.mrf.mxu0
        %v1551 = vadd.f32 %v1492, %v1550
        %1552 = vmatmul.f32.gmra.mxu0 %v1454
        %v1553 = vpop.f32.mrf.mxu0
        %v1554 = vadd.f32 %v1492, %v1553
        %1555 = vmatmul.f32.gmra.mxu0 %v1456
        %v1556 = vpop.f32.mrf.mxu0
        %v1557 = vadd.f32 %v1492, %v1556
        %1558 = vdwg.mxu0
        %1559 = vmatpush.msra.mxu0 %v1489
        %1560 = vmatpush.msra.mxu0 %v1488
        %1561 = vmatpush.msra.mxu0 %v1487
        %1562 = vmatpush.msra.mxu0 %v1486
        %1563 = vmatpush.msra.mxu0 %v1485
        %1564 = vmatpush.msra.mxu0 %v1484
        %1565 = vmatpush.msra.mxu0 %v1483
        %1566 = vmatpush.msra.mxu0 %v1482
        %1567 = vmatpush.msra.mxu0 %v1481
        %1568 = vmatpush.msra.mxu0 %v1480
        %1569 = vmatpush.msra.mxu0 %v1479
        %1570 = vmatpush.msra.mxu0 %v1478
        %1571 = vmatpush.msra.mxu0 %v1477
        %1572 = vmatpush.msra.mxu0 %v1476
        %1573 = vmatpush.msra.mxu0 %v1475
        %1574 = vmatpush.msra.mxu0 %v1474
        %1575 = vmatmul.f32.gmra.mxu0 %v1427
        %v1576 = vpop.f32.mrf.mxu0
        %v1577 = vadd.f32 %v1512, %v1576
        %1578 = vmatmul.f32.gmra.mxu0 %v1429
        %v1579 = vpop.f32.mrf.mxu0
        %v1580 = vadd.f32 %v1515, %v1579
        %1581 = vmatmul.f32.gmra.mxu0 %v1431
        %v1582 = vpop.f32.mrf.mxu0
        %v1583 = vadd.f32 %v1518, %v1582
        %1584 = vmatmul.f32.gmra.mxu0 %v1433
        %v1585 = vpop.f32.mrf.mxu0
        %v1586 = vadd.f32 %v1521, %v1585
        %1587 = vmatmul.f32.gmra.mxu0 %v1435
        %v1588 = vpop.f32.mrf.mxu0
        %v1589 = vadd.f32 %v1524, %v1588
        %1590 = vmatmul.f32.gmra.mxu0 %v1437
        %v1591 = vpop.f32.mrf.mxu0
        %v1592 = vadd.f32 %v1527, %v1591
        %1593 = vmatmul.f32.gmra.mxu0 %v1439
        %v1594 = vpop.f32.mrf.mxu0
        %v1595 = vadd.f32 %v1530, %v1594
        %1596 = vmatmul.f32.gmra.mxu0 %v1441
        %v1597 = vpop.f32.mrf.mxu0
        %v1598 = vadd.f32 %v1533, %v1597
        %1599 = vmatmul.f32.gmra.mxu0 %v1443
        %v1600 = vpop.f32.mrf.mxu0
        %v1601 = vadd.f32 %v1536, %v1600
        %1602 = vmatmul.f32.gmra.mxu0 %v1445
        %v1603 = vpop.f32.mrf.mxu0
        %v1604 = vadd.f32 %v1539, %v1603
        %1605 = vmatmul.f32.gmra.mxu0 %v1447
        %v1606 = vpop.f32.mrf.mxu0
        %v1607 = vadd.f32 %v1542, %v1606
        %1608 = vmatmul.f32.gmra.mxu0 %v1449
        %v1609 = vpop.f32.mrf.mxu0
        %v1610 = vadd.f32 %v1545, %v1609
        %1611 = vmatmul.f32.gmra.mxu0 %v1451
        %v1612 = vpop.f32.mrf.mxu0
        %v1613 = vadd.f32 %v1548, %v1612
        %1614 = vmatmul.f32.gmra.mxu0 %v1453
        %v1615 = vpop.f32.mrf.mxu0
        %v1616 = vadd.f32 %v1551, %v1615
        %1617 = vmatmul.f32.gmra.mxu0 %v1455
        %v1618 = vpop.f32.mrf.mxu0
        %v1619 = vadd.f32 %v1554, %v1618
        %1620 = vmatmul.f32.gmra.mxu0 %v1457
        %v1621 = vpop.f32.mrf.mxu0
        %v1622 = vadd.f32 %v1557, %v1621
        %1623 = vdwg.mxu0
        %v1624 = vmax.f32 %v1577, 0.0
        %v1625 = vmax.f32 %v1580, 0.0
        %v1626 = vmax.f32 %v1583, 0.0
        %v1627 = vmax.f32 %v1586, 0.0
        %v1628 = vmax.f32 %v1589, 0.0
        %v1629 = vmax.f32 %v1592, 0.0
        %v1630 = vmax.f32 %v1595, 0.0
        %v1631 = vmax.f32 %v1598, 0.0
        %v1632 = vmax.f32 %v1601, 0.0
        %v1633 = vmax.f32 %v1604, 0.0
        %v1634 = vmax.f32 %v1607, 0.0
        %v1635 = vmax.f32 %v1610, 0.0
        %v1636 = vmax.f32 %v1613, 0.0
        %v1637 = vmax.f32 %v1616, 0.0
        %v1638 = vmax.f32 %v1619, 0.0
        %v1639 = vmax.f32 %v1622, 0.0
        %v1640 = vld [vmem:[%s7] sm:$0xff]
        %v1641 = vld [vmem:[%s7 + $0x8] sm:$0xff]
        %v1642 = vld [vmem:[%s7 + $0x10] sm:$0xff]
        %v1643 = vld [vmem:[%s7 + $0x18] sm:$0xff]
        %v1644 = vld [vmem:[%s7 + $0x20] sm:$0xff]
        %v1645 = vld [vmem:[%s7 + $0x28] sm:$0xff]
        %v1646 = vld [vmem:[%s7 + $0x30] sm:$0xff]
        %v1647 = vld [vmem:[%s7 + $0x38] sm:$0xff]
        %v1648 = vld [vmem:[%s7 + $0x40] sm:$0xff]
        %v1649 = vld [vmem:[%s7 + $0x48] sm:$0xff]
        %v1650 = vld [vmem:[%s7 + $0x50] sm:$0xff]
        %v1651 = vld [vmem:[%s7 + $0x58] sm:$0xff]
        %v1652 = vld [vmem:[%s7 + $0x60] sm:$0xff]
        %v1653 = vld [vmem:[%s7 + $0x68] sm:$0xff]
        %v1654 = vld [vmem:[%s7 + $0x70] sm:$0xff]
        %v1655 = vld [vmem:[%s7 + $0x78] sm:$0xff]
        %v1656 = vld [vmem:[%s8] sm:$0x1]
        %v1658 = vperm.slane %v1656, 0
        %1660 = vmatpush.msra.mxu0 %v1655
        %1661 = vmatpush.msra.mxu0 %v1654
        %1662 = vmatpush.msra.mxu0 %v1653
        %1663 = vmatpush.msra.mxu0 %v1652
        %1664 = vmatpush.msra.mxu0 %v1651
        %1665 = vmatpush.msra.mxu0 %v1650
        %1666 = vmatpush.msra.mxu0 %v1649
        %1667 = vmatpush.msra.mxu0 %v1648
        %1668 = vmatpush.msra.mxu0 %v1647
        %1669 = vmatpush.msra.mxu0 %v1646
        %1670 = vmatpush.msra.mxu0 %v1645
        %1671 = vmatpush.msra.mxu0 %v1644
        %1672 = vmatpush.msra.mxu0 %v1643
        %1673 = vmatpush.msra.mxu0 %v1642
        %1674 = vmatpush.msra.mxu0 %v1641
        %1675 = vmatpush.msra.mxu0 %v1640
        %1676 = vmatmul.f32.gmra.mxu0 %v1624
        %v1677 = vpop.f32.mrf.mxu0
        %v1678 = vadd.f32 %v1658, %v1677
        %1679 = vmatmul.f32.gmra.mxu0 %v1625
        %v1680 = vpop.f32.mrf.mxu0
        %v1681 = vadd.f32 %v1658, %v1680
        %1682 = vmatmul.f32.gmra.mxu0 %v1626
        %v1683 = vpop.f32.mrf.mxu0
        %v1684 = vadd.f32 %v1658, %v1683
        %1685 = vmatmul.f32.gmra.mxu0 %v1627
        %v1686 = vpop.f32.mrf.mxu0
        %v1687 = vadd.f32 %v1658, %v1686
        %1688 = vmatmul.f32.gmra.mxu0 %v1628
        %v1689 = vpop.f32.mrf.mxu0
        %v1690 = vadd.f32 %v1658, %v1689
        %1691 = vmatmul.f32.gmra.mxu0 %v1629
        %v1692 = vpop.f32.mrf.mxu0
        %v1693 = vadd.f32 %v1658, %v1692
        %1694 = vmatmul.f32.gmra.mxu0 %v1630
        %v1695 = vpop.f32.mrf.mxu0
        %v1696 = vadd.f32 %v1658, %v1695
        %1697 = vmatmul.f32.gmra.mxu0 %v1631
        %v1698 = vpop.f32.mrf.mxu0
        %v1699 = vadd.f32 %v1658, %v1698
        %1700 = vmatmul.f32.gmra.mxu0 %v1632
        %v1701 = vpop.f32.mrf.mxu0
        %v1702 = vadd.f32 %v1658, %v1701
        %1703 = vmatmul.f32.gmra.mxu0 %v1633
        %v1704 = vpop.f32.mrf.mxu0
        %v1705 = vadd.f32 %v1658, %v1704
        %1706 = vmatmul.f32.gmra.mxu0 %v1634
        %v1707 = vpop.f32.mrf.mxu0
        %v1708 = vadd.f32 %v1658, %v1707
        %1709 = vmatmul.f32.gmra.mxu0 %v1635
        %v1710 = vpop.f32.mrf.mxu0
        %v1711 = vadd.f32 %v1658, %v1710
        %1712 = vmatmul.f32.gmra.mxu0 %v1636
        %v1713 = vpop.f32.mrf.mxu0
        %v1714 = vadd.f32 %v1658, %v1713
        %1715 = vmatmul.f32.gmra.mxu0 %v1637
        %v1716 = vpop.f32.mrf.mxu0
        %v1717 = vadd.f32 %v1658, %v1716
        %1718 = vmatmul.f32.gmra.mxu0 %v1638
        %v1719 = vpop.f32.mrf.mxu0
        %v1720 = vadd.f32 %v1658, %v1719
        %1721 = vmatmul.f32.gmra.mxu0 %v1639
        %v1722 = vpop.f32.mrf.mxu0
        %v1723 = vadd.f32 %v1658, %v1722
        %1724 = vdwg.mxu0
        %1725 = vst [vmem:[%s351] sm:$0xff] %v1678
        %1726 = vst [vmem:[%s351 + $0x8] sm:$0xff] %v1681
        %1727 = vst [vmem:[%s351 + $0x10] sm:$0xff] %v1684
        %1728 = vst [vmem:[%s351 + $0x18] sm:$0xff] %v1687
        %1729 = vst [vmem:[%s351 + $0x20] sm:$0xff] %v1690
        %1730 = vst [vmem:[%s351 + $0x28] sm:$0xff] %v1693
        %1731 = vst [vmem:[%s351 + $0x30] sm:$0xff] %v1696
        %1732 = vst [vmem:[%s351 + $0x38] sm:$0xff] %v1699
        %1733 = vst [vmem:[%s351 + $0x40] sm:$0xff] %v1702
        %1734 = vst [vmem:[%s351 + $0x48] sm:$0xff] %v1705
        %1735 = vst [vmem:[%s351 + $0x50] sm:$0xff] %v1708
        %1736 = vst [vmem:[%s351 + $0x58] sm:$0xff] %v1711
        %1737 = vst [vmem:[%s351 + $0x60] sm:$0xff] %v1714
        %1738 = vst [vmem:[%s351 + $0x68] sm:$0xff] %v1717
        %1739 = vst [vmem:[%s351 + $0x70] sm:$0xff] %v1720
        %1740 = vst [vmem:[%s351 + $0x78] sm:$0xff] %v1723
        %s1741 = smul.u32 16, %s21
        %p1742 = scmp.lt.s32.totalorder %s1741, 31
        %s1743 = scalar_select %p1742, %s1741, 31
        %s1744 = smul.addr %s1743, 8
        %s1745 = scalar_lea.vmem %s9, %s1744
        // Predicated region
        $region61: #{_lambda_.1} parent=55 // pred_check
          %p1746 = pneg %p233
        $region62: #{_lambda_.1} parent=55 // pred_check_branch
          %1748 = sbr.rel (%p1746) target = $region64
        $region63: #{_lambda_.1} parent=55 // pred_region
          %s1749 = smul.u32 16, %s21
        $region64: #{_lambda_.1} parent=55 // pred_fallthru
          _
      $region56: #{_lambda_.1} parent=5 // pred_fallthru
        _
      %p1750 = scmp.le.s32.totalorder 2, %s16
      // Predicated region
      $region65: #{_lambda_.1} parent=5 // pred_check
        %p1751 = pneg %p1750
      $region66: #{_lambda_.1} parent=5 // pred_check_branch
        %1753 = sbr.rel (%p1751) target = $region68
      $region67: #{_lambda_.1} parent=5 // pred_region
        %s1754 = ssub.s32 %s16, 2
        // Predicated region
        $region69: #{_lambda_.1} parent=67 // pred_check
          %p1755 = pneg %p239
        $region70: #{_lambda_.1} parent=67 // pred_check_branch
          %1757 = sbr.rel (%p1755) target = $region72
        $region71: #{_lambda_.1} parent=67 // pred_region
          %s1758 = smul.u32 16, %s22
          %p1759 = scmp.lt.s32.totalorder %s1758, 31
          %s1760 = scalar_select %p1759, %s1758, 31
          %s1761 = smul.addr %s1760, 8
          %s1762 = scalar_lea.vmem %s9, %s1761
        $region72: #{_lambda_.1} parent=67 // pred_fallthru
          _
      $region68: #{_lambda_.1} parent=5 // pred_fallthru
        _
    $region6: #{_lambda_.1} parent=1 // loop_footer
      %s20 = sadd.s32 1, %s16
    $region7: #{_lambda_.1} parent=1 // loop_footer_branch
      %15 = sbr.rel target = $region3
    $region8: #{_lambda_.1} parent=1 // loop_exit
      _
    %1763 = vsyncpa [#allocation3], 1
    %s1764 = scalar_lea.sflag [#allocation3], 1
    %1765 = vsyncpa %s1764, 1

</llo_original>
